<compile_context>
chip_gen: v5e
topology: v5e:2x2
jax: 0.10.0
libtpu: 0.0.40
codegen_flags: <defaults>
</compile_context>

<pallas_src>
import jax
import jax.numpy as jnp
import numpy as np
from jax.experimental import pallas as pl
from jax.experimental.pallas import tpu as pltpu

HIDDEN = 32      # hidden_size (small-shape stand-in for 100)
INPUT = 32       # input_size == num_letters
LAYERS = 2       # num_layers
SEQ = 8          # sequence length
TEMPERATURE = 1.0


def _gate_math(gates, c, g_mask, H):
    """LSTM gate nonlinearity with a single fused tanh over the (1, 4H) pre-activations.

    sigmoid(x) = 0.5*tanh(x/2) + 0.5, so scale the i/f/o thirds by 0.5 (the g slice is
    left untouched via the hoisted lane mask), take ONE tanh over the whole gate vector,
    then recover i/f/o with a cheap VPU affine. Two EUP pushes per step total
    (this tanh + tanh(c_new)) instead of three. All math stays f32.
    """
    v = jnp.where(g_mask, gates, 0.5 * gates)
    tv = jnp.tanh(v)
    sig = 0.5 * tv + 0.5
    i = sig[:, 0 * H:1 * H]
    f = sig[:, 1 * H:2 * H]
    g = tv[:, 2 * H:3 * H]
    o = sig[:, 3 * H:4 * H]
    c_new = f * c + i * g
    h_new = o * jnp.tanh(c_new)
    return h_new, c_new


def lstm_kernel(x_ref, h0_ref, c0_ref,
                wih0_ref, whh0_ref, b0_ref,
                w1s_ref, b1_ref,
                wfc_ref, bfc_ref,
                out_ref, hn_ref, cn_ref,
                seq1_scratch):
    H = HIDDEN
    T = x_ref.shape[0]
    f32 = jnp.float32
    bf16 = jnp.bfloat16

    # Weights stay bf16 (MXU-native); f32 accumulation via preferred_element_type.
    whh0 = whh0_ref[...]
    w1s = w1s_ref[...]
    wfc = wfc_ref[...]
    b0 = b0_ref[...]
    b1 = b1_ref[...]

    # Hoisted lane mask selecting the 'g' (tanh) quarter of the [i, f, g, o] gate vector.
    col = jax.lax.broadcasted_iota(jnp.int32, (1, 4 * H), 1)
    g_mask = (col >= 2 * H) & (col < 3 * H)

    # Layer-0 input-side matmul hoisted off the serial chain: (T, I) @ (I, 4H).
    xg0 = jnp.dot(x_ref[...].astype(bf16), wih0_ref[...],
                  preferred_element_type=f32) + b0

    h0 = h0_ref[0:1, :]
    c0 = c0_ref[0:1, :]
    h1 = h0_ref[1:2, :]
    c1 = c0_ref[1:2, :]

    # Fully unrolled, interleaved recurrences: layer-1 step t consumes h0_t immediately via
    # one fused (1,2H)@(2H,4H) dot, so layer0[t+1] and layer1[t] can overlap.
    for t in range(T):
        # layer 0, step t
        gates0 = xg0[t:t + 1, :] + jnp.dot(h0.astype(bf16), whh0,
                                           preferred_element_type=f32)
        h0, c0 = _gate_math(gates0, c0, g_mask, H)

        # layer 1, step t: concat([h0_t, h1_{t-1}]) @ vstack(W_ih1^T, W_hh1^T)
        in1 = jnp.concatenate([h0, h1], axis=1).astype(bf16)
        gates1 = jnp.dot(in1, w1s, preferred_element_type=f32) + b1
        h1, c1 = _gate_math(gates1, c1, g_mask, H)

        # Static row index; these stores hide under the remaining recurrence steps.
        seq1_scratch[t:t + 1, :] = h1

    hn_ref[0:1, :] = h0
    cn_ref[0:1, :] = c0
    hn_ref[1:2, :] = h1
    cn_ref[1:2, :] = c1

    # fc + log-softmax over class dim (temperature = 1): one (T,H)@(H,C) matmul epilogue.
    seq1 = seq1_scratch[...]
    logits = jnp.dot(seq1.astype(bf16), wfc, preferred_element_type=f32) + bfc_ref[...]
    logits = logits * (1.0 / TEMPERATURE)
    m = jnp.max(logits, axis=1, keepdims=True)
    z = logits - m
    lse = jnp.log(jnp.sum(jnp.exp(z), axis=1, keepdims=True))
    out_ref[...] = z - lse


def init_params(key):
    """Deterministic parameter init mimicking PyTorch's U(-1/sqrt(H), 1/sqrt(H)).

    Weight matrices are stored in bf16 (MXU-native, halves weight DMA bytes); biases in f32.
    Layer-1 weights are pre-stacked into W1^T = vstack(W_ih1^T, W_hh1^T) for the fused
    per-step layer-1 dot.
    """
    k = 1.0 / np.sqrt(HIDDEN)
    keys = jax.random.split(key, 10)
    u = lambda kk, shape: jax.random.uniform(kk, shape, jnp.float32, -k, k)
    wih1_t = u(keys[4], (HIDDEN, 4 * HIDDEN)).astype(jnp.bfloat16)
    whh1_t = u(keys[5], (HIDDEN, 4 * HIDDEN)).astype(jnp.bfloat16)
    params = dict(
        # layer 0 (input -> hidden)
        wih0_t=u(keys[0], (INPUT, 4 * HIDDEN)).astype(jnp.bfloat16),     # W_ih^T
        whh0_t=u(keys[1], (HIDDEN, 4 * HIDDEN)).astype(jnp.bfloat16),    # W_hh^T
        b0=u(keys[2], (1, 4 * HIDDEN)) + u(keys[3], (1, 4 * HIDDEN)),    # b_ih + b_hh
        # layer 1 (hidden -> hidden), stacked: (2H, 4H)
        w1s_t=jnp.concatenate([wih1_t, whh1_t], axis=0),
        b1=u(keys[6], (1, 4 * HIDDEN)) + u(keys[7], (1, 4 * HIDDEN)),
        # fc (hidden -> num_letters)
        wfc_t=u(keys[8], (HIDDEN, INPUT)).astype(jnp.bfloat16),
        bfc=u(keys[9], (1, INPUT)),
    )
    return params


@jax.jit
def lstm_forward(x, hidden, params):
    """x: (T, 1, I); hidden: (h0, c0) each (L, 1, H). Returns (log_probs (T, I), (h_n, c_n))."""
    h0, c0 = hidden
    T = x.shape[0]
    x2 = x[:, 0, :]
    h0_2 = h0[:, 0, :]
    c0_2 = c0[:, 0, :]

    out, hn, cn = pl.pallas_call(
        lstm_kernel,
        out_shape=(jax.ShapeDtypeStruct((T, INPUT), jnp.float32),
                   jax.ShapeDtypeStruct((LAYERS, HIDDEN), jnp.float32),
                   jax.ShapeDtypeStruct((LAYERS, HIDDEN), jnp.float32)),
        in_specs=[pl.BlockSpec(memory_space=pltpu.MemorySpace.VMEM)] * 10,
        out_specs=(pl.BlockSpec(memory_space=pltpu.MemorySpace.VMEM),) * 3,
        scratch_shapes=[pltpu.VMEM((T, HIDDEN), jnp.float32)],
        # Feed hidden state back in place across generation steps: h0 -> h_n, c0 -> c_n.
        input_output_aliases={1: 1, 2: 2},
    )(x2, h0_2, c0_2,
      params["wih0_t"], params["whh0_t"], params["b0"],
      params["w1s_t"], params["b1"],
      params["wfc_t"], params["bfc"])

    return out, (hn[:, None, :], cn[:, None, :])


def lstm_forward_ref(x, hidden, params):
    """Pure-JAX reference (same bf16 dot operands, standard sigmoid/tanh) for verification.

    x: (T, 1, I); hidden: (h0, c0) each (L, 1, H). Returns (log_probs (T, I), (h_n, c_n))
    with h_n/c_n shaped (L, 1, H) to match the kernel wrapper.
    """
    h0, c0 = hidden
    T = x.shape[0]
    H = HIDDEN
    bf16 = jnp.bfloat16
    f32 = jnp.float32
    seq = x[:, 0, :]
    wih1_t = params["w1s_t"][:HIDDEN]
    whh1_t = params["w1s_t"][HIDDEN:]
    layer_w = [(params["wih0_t"], params["whh0_t"], params["b0"]),
               (wih1_t, whh1_t, params["b1"])]
    hs, cs = [], []
    for l, (wih_t, whh_t, b) in enumerate(layer_w):
        h = h0[l]                      # (1, H)
        c = c0[l]                      # (1, H)
        xg = jnp.dot(seq.astype(bf16), wih_t, preferred_element_type=f32) + b
        outs = []
        for t in range(T):
            gates = xg[t:t + 1, :] + jnp.dot(h.astype(bf16), whh_t,
                                             preferred_element_type=f32)
            i = jax.nn.sigmoid(gates[:, 0 * H:1 * H])
            f = jax.nn.sigmoid(gates[:, 1 * H:2 * H])
            g = jnp.tanh(gates[:, 2 * H:3 * H])
            o = jax.nn.sigmoid(gates[:, 3 * H:4 * H])
            c = f * c + i * g
            h = o * jnp.tanh(c)
            outs.append(h)
        seq = jnp.concatenate(outs, axis=0)
        hs.append(h)
        cs.append(c)
    logits = (jnp.dot(seq.astype(bf16), params["wfc_t"],
                      preferred_element_type=f32) + params["bfc"])
    logits = logits / TEMPERATURE
    log_probs = logits - jax.scipy.special.logsumexp(logits, axis=1, keepdims=True)
    h_n = jnp.stack(hs, axis=0)        # (L, 1, H)
    c_n = jnp.stack(cs, axis=0)        # (L, 1, H)
    return log_probs, (h_n, c_n)


if __name__ == "__main__":
    key = jax.random.PRNGKey(0)
    k_param, k_x = jax.random.split(key)
    params = init_params(k_param)

    # x: (seq_len, batch=1, input_size), hidden zero-init like initHidden()
    x = jax.random.normal(k_x, (SEQ, 1, INPUT), jnp.float32)
    h0 = jnp.zeros((LAYERS, 1, HIDDEN), jnp.float32)
    c0 = jnp.zeros((LAYERS, 1, HIDDEN), jnp.float32)

    out, (h_n, c_n) = lstm_forward(x, (h0, c0), params)
    jax.block_until_ready((out, h_n, c_n))

    # correctness check vs pure-JAX reference (identical shapes: (L, 1, H))
    # Tolerance accounts for sigmoid-via-tanh fusion and layer-1 dot fusion (ulp-level drift).
    out_r, (h_r, c_r) = lstm_forward_ref(x, (h0, c0), params)
    np.testing.assert_allclose(np.asarray(out), np.asarray(out_r), atol=2e-3, rtol=2e-3)
    np.testing.assert_allclose(np.asarray(h_n), np.asarray(h_r), atol=2e-3, rtol=2e-3)
    np.testing.assert_allclose(np.asarray(c_n), np.asarray(c_r), atol=2e-3, rtol=2e-3)

    assert out.shape == (SEQ, INPUT)
    assert h_n.shape == (LAYERS, 1, HIDDEN) and c_n.shape == (LAYERS, 1, HIDDEN)
    print("KERNEL_OK")
</pallas_src>

<mosaic_0001>
module attributes {stable_mosaic.version = 11 : i64} {
  func.func @lstm_kernel(%arg0: memref<8x32xf32, #tpu.memory_space<vmem>>, %arg1: memref<2x32xf32, #tpu.memory_space<vmem>>, %arg2: memref<2x32xf32, #tpu.memory_space<vmem>>, %arg3: memref<32x128xbf16, #tpu.memory_space<vmem>>, %arg4: memref<32x128xbf16, #tpu.memory_space<vmem>>, %arg5: memref<1x128xf32, #tpu.memory_space<vmem>>, %arg6: memref<64x128xbf16, #tpu.memory_space<vmem>>, %arg7: memref<1x128xf32, #tpu.memory_space<vmem>>, %arg8: memref<32x32xbf16, #tpu.memory_space<vmem>>, %arg9: memref<1x32xf32, #tpu.memory_space<vmem>>, %arg10: memref<8x32xf32, #tpu.memory_space<vmem>>, %arg11: memref<2x32xf32, #tpu.memory_space<vmem>>, %arg12: memref<2x32xf32, #tpu.memory_space<vmem>>, %arg13: memref<8x32xf32, #tpu.memory_space<vmem>>) attributes {dimension_semantics = [], scalar_prefetch = 0 : i64, scratch_operands = 1 : i64, tpu.core_type = #tpu.core_type<tc>} {
    %c0 = arith.constant 0 : index
    %c0_0 = arith.constant 0 : index
    %0 = vector.load %arg4[%c0, %c0_0] : memref<32x128xbf16, #tpu.memory_space<vmem>>, vector<32x128xbf16>
    %c0_1 = arith.constant 0 : index
    %c0_2 = arith.constant 0 : index
    %1 = vector.load %arg6[%c0_1, %c0_2] : memref<64x128xbf16, #tpu.memory_space<vmem>>, vector<64x128xbf16>
    %c0_3 = arith.constant 0 : index
    %c0_4 = arith.constant 0 : index
    %2 = vector.load %arg8[%c0_3, %c0_4] : memref<32x32xbf16, #tpu.memory_space<vmem>>, vector<32x32xbf16>
    %c0_5 = arith.constant 0 : index
    %c0_6 = arith.constant 0 : index
    %3 = vector.load %arg5[%c0_5, %c0_6] : memref<1x128xf32, #tpu.memory_space<vmem>>, vector<1x128xf32>
    %c0_7 = arith.constant 0 : index
    %c0_8 = arith.constant 0 : index
    %4 = vector.load %arg7[%c0_7, %c0_8] : memref<1x128xf32, #tpu.memory_space<vmem>>, vector<1x128xf32>
    %5 = tpu.iota {dimensions = array<i32: 1>} : vector<1x128xi32>
    %c64_i32 = arith.constant 64 : i32
    %6 = vector.broadcast %c64_i32 : i32 to vector<1x128xi32>
    %7 = arith.cmpi sge, %5, %6 : vector<1x128xi32>
    %c96_i32 = arith.constant 96 : i32
    %8 = vector.broadcast %c96_i32 : i32 to vector<1x128xi32>
    %9 = arith.cmpi slt, %5, %8 : vector<1x128xi32>
    %10 = arith.andi %7, %9 : vector<1x128xi1>
    %c0_9 = arith.constant 0 : index
    %c0_10 = arith.constant 0 : index
    %11 = vector.load %arg0[%c0_9, %c0_10] : memref<8x32xf32, #tpu.memory_space<vmem>>, vector<8x32xf32>
    %12 = arith.truncf %11 : vector<8x32xf32> to vector<8x32xbf16>
    %c0_11 = arith.constant 0 : index
    %c0_12 = arith.constant 0 : index
    %13 = vector.load %arg3[%c0_11, %c0_12] : memref<32x128xbf16, #tpu.memory_space<vmem>>, vector<32x128xbf16>
    %cst = arith.constant dense<0.000000e+00> : vector<8x128xf32>
    %14 = tpu.matmul %12, %13, %cst {dimension_numbers = #tpu.dot_dimension_numbers<[1], [0], [0], [1], [0, 0, 1, 1], [], []>} : vector<8x32xbf16>, vector<32x128xbf16>, vector<8x128xf32> -> vector<8x128xf32>
    %15 = vector.broadcast %3 : vector<1x128xf32> to vector<8x128xf32>
    %16 = arith.addf %14, %15 : vector<8x128xf32>
    %c0_13 = arith.constant 0 : index
    %c0_14 = arith.constant 0 : index
    %17 = vector.load %arg1[%c0_13, %c0_14] : memref<2x32xf32, #tpu.memory_space<vmem>>, vector<1x32xf32>
    %c0_15 = arith.constant 0 : index
    %c0_16 = arith.constant 0 : index
    %18 = vector.load %arg2[%c0_15, %c0_16] : memref<2x32xf32, #tpu.memory_space<vmem>>, vector<1x32xf32>
    %c1 = arith.constant 1 : index
    %c0_17 = arith.constant 0 : index
    %19 = vector.load %arg1[%c1, %c0_17] : memref<2x32xf32, #tpu.memory_space<vmem>>, vector<1x32xf32>
    %c1_18 = arith.constant 1 : index
    %c0_19 = arith.constant 0 : index
    %20 = vector.load %arg2[%c1_18, %c0_19] : memref<2x32xf32, #tpu.memory_space<vmem>>, vector<1x32xf32>
    %21 = vector.extract_strided_slice %16 {offsets = [0, 0], sizes = [1, 128], strides = [1, 1]} : vector<8x128xf32> to vector<1x128xf32>
    %22 = arith.truncf %17 : vector<1x32xf32> to vector<1x32xbf16>
    %cst_20 = arith.constant dense<0.000000e+00> : vector<1x128xf32>
    %23 = tpu.matmul %22, %0, %cst_20 {dimension_numbers = #tpu.dot_dimension_numbers<[1], [0], [0], [1], [0, 0, 1, 1], [], []>} : vector<1x32xbf16>, vector<32x128xbf16>, vector<1x128xf32> -> vector<1x128xf32>
    %24 = arith.addf %21, %23 : vector<1x128xf32>
    %cst_21 = arith.constant 5.000000e-01 : f32
    %25 = vector.broadcast %cst_21 : f32 to vector<1x128xf32>
    %26 = arith.mulf %25, %24 : vector<1x128xf32>
    %27 = arith.select %10, %24, %26 : vector<1x128xi1>, vector<1x128xf32>
    %28 = math.tanh %27 : vector<1x128xf32>
    %cst_22 = arith.constant 5.000000e-01 : f32
    %29 = vector.broadcast %cst_22 : f32 to vector<1x128xf32>
    %30 = arith.mulf %29, %28 : vector<1x128xf32>
    %cst_23 = arith.constant 5.000000e-01 : f32
    %31 = vector.broadcast %cst_23 : f32 to vector<1x128xf32>
    %32 = arith.addf %30, %31 : vector<1x128xf32>
    %33 = vector.extract_strided_slice %32 {offsets = [0, 0], sizes = [1, 32], strides = [1, 1]} : vector<1x128xf32> to vector<1x32xf32>
    %34 = vector.extract_strided_slice %32 {offsets = [0, 32], sizes = [1, 32], strides = [1, 1]} : vector<1x128xf32> to vector<1x32xf32>
    %35 = vector.extract_strided_slice %28 {offsets = [0, 64], sizes = [1, 32], strides = [1, 1]} : vector<1x128xf32> to vector<1x32xf32>
    %36 = vector.extract_strided_slice %32 {offsets = [0, 96], sizes = [1, 32], strides = [1, 1]} : vector<1x128xf32> to vector<1x32xf32>
    %37 = arith.mulf %34, %18 : vector<1x32xf32>
    %38 = arith.mulf %33, %35 : vector<1x32xf32>
    %39 = arith.addf %37, %38 : vector<1x32xf32>
    %40 = math.tanh %39 : vector<1x32xf32>
    %41 = arith.mulf %36, %40 : vector<1x32xf32>
    %42 = tpu.concatenate %41, %19 in 1 : vector<1x32xf32>, vector<1x32xf32> -> vector<1x64xf32>
    %43 = arith.truncf %42 : vector<1x64xf32> to vector<1x64xbf16>
    %cst_24 = arith.constant dense<0.000000e+00> : vector<1x128xf32>
    %44 = tpu.matmul %43, %1, %cst_24 {dimension_numbers = #tpu.dot_dimension_numbers<[1], [0], [0], [1], [0, 0, 1, 1], [], []>} : vector<1x64xbf16>, vector<64x128xbf16>, vector<1x128xf32> -> vector<1x128xf32>
    %45 = arith.addf %44, %4 : vector<1x128xf32>
    %cst_25 = arith.constant 5.000000e-01 : f32
    %46 = vector.broadcast %cst_25 : f32 to vector<1x128xf32>
    %47 = arith.mulf %46, %45 : vector<1x128xf32>
    %48 = arith.select %10, %45, %47 : vector<1x128xi1>, vector<1x128xf32>
    %49 = math.tanh %48 : vector<1x128xf32>
    %cst_26 = arith.constant 5.000000e-01 : f32
    %50 = vector.broadcast %cst_26 : f32 to vector<1x128xf32>
    %51 = arith.mulf %50, %49 : vector<1x128xf32>
    %cst_27 = arith.constant 5.000000e-01 : f32
    %52 = vector.broadcast %cst_27 : f32 to vector<1x128xf32>
    %53 = arith.addf %51, %52 : vector<1x128xf32>
    %54 = vector.extract_strided_slice %53 {offsets = [0, 0], sizes = [1, 32], strides = [1, 1]} : vector<1x128xf32> to vector<1x32xf32>
    %55 = vector.extract_strided_slice %53 {offsets = [0, 32], sizes = [1, 32], strides = [1, 1]} : vector<1x128xf32> to vector<1x32xf32>
    %56 = vector.extract_strided_slice %49 {offsets = [0, 64], sizes = [1, 32], strides = [1, 1]} : vector<1x128xf32> to vector<1x32xf32>
    %57 = vector.extract_strided_slice %53 {offsets = [0, 96], sizes = [1, 32], strides = [1, 1]} : vector<1x128xf32> to vector<1x32xf32>
    %58 = arith.mulf %55, %20 : vector<1x32xf32>
    %59 = arith.mulf %54, %56 : vector<1x32xf32>
    %60 = arith.addf %58, %59 : vector<1x32xf32>
    %61 = math.tanh %60 : vector<1x32xf32>
    %62 = arith.mulf %57, %61 : vector<1x32xf32>
    %c0_28 = arith.constant 0 : index
    %c0_29 = arith.constant 0 : index
    %63 = vector.load %arg13[%c0_28, %c0_29] : memref<8x32xf32, #tpu.memory_space<vmem>>, vector<1x32xf32>
    tpu.vector_store %arg13[%c0_28, %c0_29], %62 {strides = array<i32>} : memref<8x32xf32, #tpu.memory_space<vmem>>, vector<1x32xf32>,
    %64 = vector.extract_strided_slice %16 {offsets = [1, 0], sizes = [1, 128], strides = [1, 1]} : vector<8x128xf32> to vector<1x128xf32>
    %65 = arith.truncf %41 : vector<1x32xf32> to vector<1x32xbf16>
    %cst_30 = arith.constant dense<0.000000e+00> : vector<1x128xf32>
    %66 = tpu.matmul %65, %0, %cst_30 {dimension_numbers = #tpu.dot_dimension_numbers<[1], [0], [0], [1], [0, 0, 1, 1], [], []>} : vector<1x32xbf16>, vector<32x128xbf16>, vector<1x128xf32> -> vector<1x128xf32>
    %67 = arith.addf %64, %66 : vector<1x128xf32>
    %cst_31 = arith.constant 5.000000e-01 : f32
    %68 = vector.broadcast %cst_31 : f32 to vector<1x128xf32>
    %69 = arith.mulf %68, %67 : vector<1x128xf32>
    %70 = arith.select %10, %67, %69 : vector<1x128xi1>, vector<1x128xf32>
    %71 = math.tanh %70 : vector<1x128xf32>
    %cst_32 = arith.constant 5.000000e-01 : f32
    %72 = vector.broadcast %cst_32 : f32 to vector<1x128xf32>
    %73 = arith.mulf %72, %71 : vector<1x128xf32>
    %cst_33 = arith.constant 5.000000e-01 : f32
    %74 = vector.broadcast %cst_33 : f32 to vector<1x128xf32>
    %75 = arith.addf %73, %74 : vector<1x128xf32>
    %76 = vector.extract_strided_slice %75 {offsets = [0, 0], sizes = [1, 32], strides = [1, 1]} : vector<1x128xf32> to vector<1x32xf32>
    %77 = vector.extract_strided_slice %75 {offsets = [0, 32], sizes = [1, 32], strides = [1, 1]} : vector<1x128xf32> to vector<1x32xf32>
    %78 = vector.extract_strided_slice %71 {offsets = [0, 64], sizes = [1, 32], strides = [1, 1]} : vector<1x128xf32> to vector<1x32xf32>
    %79 = vector.extract_strided_slice %75 {offsets = [0, 96], sizes = [1, 32], strides = [1, 1]} : vector<1x128xf32> to vector<1x32xf32>
    %80 = arith.mulf %77, %39 : vector<1x32xf32>
    %81 = arith.mulf %76, %78 : vector<1x32xf32>
    %82 = arith.addf %80, %81 : vector<1x32xf32>
    %83 = math.tanh %82 : vector<1x32xf32>
    %84 = arith.mulf %79, %83 : vector<1x32xf32>
    %85 = tpu.concatenate %84, %62 in 1 : vector<1x32xf32>, vector<1x32xf32> -> vector<1x64xf32>
    %86 = arith.truncf %85 : vector<1x64xf32> to vector<1x64xbf16>
    %cst_34 = arith.constant dense<0.000000e+00> : vector<1x128xf32>
    %87 = tpu.matmul %86, %1, %cst_34 {dimension_numbers = #tpu.dot_dimension_numbers<[1], [0], [0], [1], [0, 0, 1, 1], [], []>} : vector<1x64xbf16>, vector<64x128xbf16>, vector<1x128xf32> -> vector<1x128xf32>
    %88 = arith.addf %87, %4 : vector<1x128xf32>
    %cst_35 = arith.constant 5.000000e-01 : f32
    %89 = vector.broadcast %cst_35 : f32 to vector<1x128xf32>
    %90 = arith.mulf %89, %88 : vector<1x128xf32>
    %91 = arith.select %10, %88, %90 : vector<1x128xi1>, vector<1x128xf32>
    %92 = math.tanh %91 : vector<1x128xf32>
    %cst_36 = arith.constant 5.000000e-01 : f32
    %93 = vector.broadcast %cst_36 : f32 to vector<1x128xf32>
    %94 = arith.mulf %93, %92 : vector<1x128xf32>
    %cst_37 = arith.constant 5.000000e-01 : f32
    %95 = vector.broadcast %cst_37 : f32 to vector<1x128xf32>
    %96 = arith.addf %94, %95 : vector<1x128xf32>
    %97 = vector.extract_strided_slice %96 {offsets = [0, 0], sizes = [1, 32], strides = [1, 1]} : vector<1x128xf32> to vector<1x32xf32>
    %98 = vector.extract_strided_slice %96 {offsets = [0, 32], sizes = [1, 32], strides = [1, 1]} : vector<1x128xf32> to vector<1x32xf32>
    %99 = vector.extract_strided_slice %92 {offsets = [0, 64], sizes = [1, 32], strides = [1, 1]} : vector<1x128xf32> to vector<1x32xf32>
    %100 = vector.extract_strided_slice %96 {offsets = [0, 96], sizes = [1, 32], strides = [1, 1]} : vector<1x128xf32> to vector<1x32xf32>
    %101 = arith.mulf %98, %60 : vector<1x32xf32>
    %102 = arith.mulf %97, %99 : vector<1x32xf32>
    %103 = arith.addf %101, %102 : vector<1x32xf32>
    %104 = math.tanh %103 : vector<1x32xf32>
    %105 = arith.mulf %100, %104 : vector<1x32xf32>
    %c1_38 = arith.constant 1 : index
    %c0_39 = arith.constant 0 : index
    %106 = vector.load %arg13[%c1_38, %c0_39] : memref<8x32xf32, #tpu.memory_space<vmem>>, vector<1x32xf32>
    tpu.vector_store %arg13[%c1_38, %c0_39], %105 {strides = array<i32>} : memref<8x32xf32, #tpu.memory_space<vmem>>, vector<1x32xf32>,
    %107 = vector.extract_strided_slice %16 {offsets = [2, 0], sizes = [1, 128], strides = [1, 1]} : vector<8x128xf32> to vector<1x128xf32>
    %108 = arith.truncf %84 : vector<1x32xf32> to vector<1x32xbf16>
    %cst_40 = arith.constant dense<0.000000e+00> : vector<1x128xf32>
    %109 = tpu.matmul %108, %0, %cst_40 {dimension_numbers = #tpu.dot_dimension_numbers<[1], [0], [0], [1], [0, 0, 1, 1], [], []>} : vector<1x32xbf16>, vector<32x128xbf16>, vector<1x128xf32> -> vector<1x128xf32>
    %110 = arith.addf %107, %109 : vector<1x128xf32>
    %cst_41 = arith.constant 5.000000e-01 : f32
    %111 = vector.broadcast %cst_41 : f32 to vector<1x128xf32>
    %112 = arith.mulf %111, %110 : vector<1x128xf32>
    %113 = arith.select %10, %110, %112 : vector<1x128xi1>, vector<1x128xf32>
    %114 = math.tanh %113 : vector<1x128xf32>
    %cst_42 = arith.constant 5.000000e-01 : f32
    %115 = vector.broadcast %cst_42 : f32 to vector<1x128xf32>
    %116 = arith.mulf %115, %114 : vector<1x128xf32>
    %cst_43 = arith.constant 5.000000e-01 : f32
    %117 = vector.broadcast %cst_43 : f32 to vector<1x128xf32>
    %118 = arith.addf %116, %117 : vector<1x128xf32>
    %119 = vector.extract_strided_slice %118 {offsets = [0, 0], sizes = [1, 32], strides = [1, 1]} : vector<1x128xf32> to vector<1x32xf32>
    %120 = vector.extract_strided_slice %118 {offsets = [0, 32], sizes = [1, 32], strides = [1, 1]} : vector<1x128xf32> to vector<1x32xf32>
    %121 = vector.extract_strided_slice %114 {offsets = [0, 64], sizes = [1, 32], strides = [1, 1]} : vector<1x128xf32> to vector<1x32xf32>
    %122 = vector.extract_strided_slice %118 {offsets = [0, 96], sizes = [1, 32], strides = [1, 1]} : vector<1x128xf32> to vector<1x32xf32>
    %123 = arith.mulf %120, %82 : vector<1x32xf32>
    %124 = arith.mulf %119, %121 : vector<1x32xf32>
    %125 = arith.addf %123, %124 : vector<1x32xf32>
    %126 = math.tanh %125 : vector<1x32xf32>
    %127 = arith.mulf %122, %126 : vector<1x32xf32>
    %128 = tpu.concatenate %127, %105 in 1 : vector<1x32xf32>, vector<1x32xf32> -> vector<1x64xf32>
    %129 = arith.truncf %128 : vector<1x64xf32> to vector<1x64xbf16>
    %cst_44 = arith.constant dense<0.000000e+00> : vector<1x128xf32>
    %130 = tpu.matmul %129, %1, %cst_44 {dimension_numbers = #tpu.dot_dimension_numbers<[1], [0], [0], [1], [0, 0, 1, 1], [], []>} : vector<1x64xbf16>, vector<64x128xbf16>, vector<1x128xf32> -> vector<1x128xf32>
    %131 = arith.addf %130, %4 : vector<1x128xf32>
    %cst_45 = arith.constant 5.000000e-01 : f32
    %132 = vector.broadcast %cst_45 : f32 to vector<1x128xf32>
    %133 = arith.mulf %132, %131 : vector<1x128xf32>
    %134 = arith.select %10, %131, %133 : vector<1x128xi1>, vector<1x128xf32>
    %135 = math.tanh %134 : vector<1x128xf32>
    %cst_46 = arith.constant 5.000000e-01 : f32
    %136 = vector.broadcast %cst_46 : f32 to vector<1x128xf32>
    %137 = arith.mulf %136, %135 : vector<1x128xf32>
    %cst_47 = arith.constant 5.000000e-01 : f32
    %138 = vector.broadcast %cst_47 : f32 to vector<1x128xf32>
    %139 = arith.addf %137, %138 : vector<1x128xf32>
    %140 = vector.extract_strided_slice %139 {offsets = [0, 0], sizes = [1, 32], strides = [1, 1]} : vector<1x128xf32> to vector<1x32xf32>
    %141 = vector.extract_strided_slice %139 {offsets = [0, 32], sizes = [1, 32], strides = [1, 1]} : vector<1x128xf32> to vector<1x32xf32>
    %142 = vector.extract_strided_slice %135 {offsets = [0, 64], sizes = [1, 32], strides = [1, 1]} : vector<1x128xf32> to vector<1x32xf32>
    %143 = vector.extract_strided_slice %139 {offsets = [0, 96], sizes = [1, 32], strides = [1, 1]} : vector<1x128xf32> to vector<1x32xf32>
    %144 = arith.mulf %141, %103 : vector<1x32xf32>
    %145 = arith.mulf %140, %142 : vector<1x32xf32>
    %146 = arith.addf %144, %145 : vector<1x32xf32>
    %147 = math.tanh %146 : vector<1x32xf32>
    %148 = arith.mulf %143, %147 : vector<1x32xf32>
    %c2 = arith.constant 2 : index
    %c0_48 = arith.constant 0 : index
    %149 = vector.load %arg13[%c2, %c0_48] : memref<8x32xf32, #tpu.memory_space<vmem>>, vector<1x32xf32>
    tpu.vector_store %arg13[%c2, %c0_48], %148 {strides = array<i32>} : memref<8x32xf32, #tpu.memory_space<vmem>>, vector<1x32xf32>,
    %150 = vector.extract_strided_slice %16 {offsets = [3, 0], sizes = [1, 128], strides = [1, 1]} : vector<8x128xf32> to vector<1x128xf32>
    %151 = arith.truncf %127 : vector<1x32xf32> to vector<1x32xbf16>
    %cst_49 = arith.constant dense<0.000000e+00> : vector<1x128xf32>
    %152 = tpu.matmul %151, %0, %cst_49 {dimension_numbers = #tpu.dot_dimension_numbers<[1], [0], [0], [1], [0, 0, 1, 1], [], []>} : vector<1x32xbf16>, vector<32x128xbf16>, vector<1x128xf32> -> vector<1x128xf32>
    %153 = arith.addf %150, %152 : vector<1x128xf32>
    %cst_50 = arith.constant 5.000000e-01 : f32
    %154 = vector.broadcast %cst_50 : f32 to vector<1x128xf32>
    %155 = arith.mulf %154, %153 : vector<1x128xf32>
    %156 = arith.select %10, %153, %155 : vector<1x128xi1>, vector<1x128xf32>
    %157 = math.tanh %156 : vector<1x128xf32>
    %cst_51 = arith.constant 5.000000e-01 : f32
    %158 = vector.broadcast %cst_51 : f32 to vector<1x128xf32>
    %159 = arith.mulf %158, %157 : vector<1x128xf32>
    %cst_52 = arith.constant 5.000000e-01 : f32
    %160 = vector.broadcast %cst_52 : f32 to vector<1x128xf32>
    %161 = arith.addf %159, %160 : vector<1x128xf32>
    %162 = vector.extract_strided_slice %161 {offsets = [0, 0], sizes = [1, 32], strides = [1, 1]} : vector<1x128xf32> to vector<1x32xf32>
    %163 = vector.extract_strided_slice %161 {offsets = [0, 32], sizes = [1, 32], strides = [1, 1]} : vector<1x128xf32> to vector<1x32xf32>
    %164 = vector.extract_strided_slice %157 {offsets = [0, 64], sizes = [1, 32], strides = [1, 1]} : vector<1x128xf32> to vector<1x32xf32>
    %165 = vector.extract_strided_slice %161 {offsets = [0, 96], sizes = [1, 32], strides = [1, 1]} : vector<1x128xf32> to vector<1x32xf32>
    %166 = arith.mulf %163, %125 : vector<1x32xf32>
    %167 = arith.mulf %162, %164 : vector<1x32xf32>
    %168 = arith.addf %166, %167 : vector<1x32xf32>
    %169 = math.tanh %168 : vector<1x32xf32>
    %170 = arith.mulf %165, %169 : vector<1x32xf32>
    %171 = tpu.concatenate %170, %148 in 1 : vector<1x32xf32>, vector<1x32xf32> -> vector<1x64xf32>
    %172 = arith.truncf %171 : vector<1x64xf32> to vector<1x64xbf16>
    %cst_53 = arith.constant dense<0.000000e+00> : vector<1x128xf32>
    %173 = tpu.matmul %172, %1, %cst_53 {dimension_numbers = #tpu.dot_dimension_numbers<[1], [0], [0], [1], [0, 0, 1, 1], [], []>} : vector<1x64xbf16>, vector<64x128xbf16>, vector<1x128xf32> -> vector<1x128xf32>
    %174 = arith.addf %173, %4 : vector<1x128xf32>
    %cst_54 = arith.constant 5.000000e-01 : f32
    %175 = vector.broadcast %cst_54 : f32 to vector<1x128xf32>
    %176 = arith.mulf %175, %174 : vector<1x128xf32>
    %177 = arith.select %10, %174, %176 : vector<1x128xi1>, vector<1x128xf32>
    %178 = math.tanh %177 : vector<1x128xf32>
    %cst_55 = arith.constant 5.000000e-01 : f32
    %179 = vector.broadcast %cst_55 : f32 to vector<1x128xf32>
    %180 = arith.mulf %179, %178 : vector<1x128xf32>
    %cst_56 = arith.constant 5.000000e-01 : f32
    %181 = vector.broadcast %cst_56 : f32 to vector<1x128xf32>
    %182 = arith.addf %180, %181 : vector<1x128xf32>
    %183 = vector.extract_strided_slice %182 {offsets = [0, 0], sizes = [1, 32], strides = [1, 1]} : vector<1x128xf32> to vector<1x32xf32>
    %184 = vector.extract_strided_slice %182 {offsets = [0, 32], sizes = [1, 32], strides = [1, 1]} : vector<1x128xf32> to vector<1x32xf32>
    %185 = vector.extract_strided_slice %178 {offsets = [0, 64], sizes = [1, 32], strides = [1, 1]} : vector<1x128xf32> to vector<1x32xf32>
    %186 = vector.extract_strided_slice %182 {offsets = [0, 96], sizes = [1, 32], strides = [1, 1]} : vector<1x128xf32> to vector<1x32xf32>
    %187 = arith.mulf %184, %146 : vector<1x32xf32>
    %188 = arith.mulf %183, %185 : vector<1x32xf32>
    %189 = arith.addf %187, %188 : vector<1x32xf32>
    %190 = math.tanh %189 : vector<1x32xf32>
    %191 = arith.mulf %186, %190 : vector<1x32xf32>
    %c3 = arith.constant 3 : index
    %c0_57 = arith.constant 0 : index
    %192 = vector.load %arg13[%c3, %c0_57] : memref<8x32xf32, #tpu.memory_space<vmem>>, vector<1x32xf32>
    tpu.vector_store %arg13[%c3, %c0_57], %191 {strides = array<i32>} : memref<8x32xf32, #tpu.memory_space<vmem>>, vector<1x32xf32>,
    %193 = vector.extract_strided_slice %16 {offsets = [4, 0], sizes = [1, 128], strides = [1, 1]} : vector<8x128xf32> to vector<1x128xf32>
    %194 = arith.truncf %170 : vector<1x32xf32> to vector<1x32xbf16>
    %cst_58 = arith.constant dense<0.000000e+00> : vector<1x128xf32>
    %195 = tpu.matmul %194, %0, %cst_58 {dimension_numbers = #tpu.dot_dimension_numbers<[1], [0], [0], [1], [0, 0, 1, 1], [], []>} : vector<1x32xbf16>, vector<32x128xbf16>, vector<1x128xf32> -> vector<1x128xf32>
    %196 = arith.addf %193, %195 : vector<1x128xf32>
    %cst_59 = arith.constant 5.000000e-01 : f32
    %197 = vector.broadcast %cst_59 : f32 to vector<1x128xf32>
    %198 = arith.mulf %197, %196 : vector<1x128xf32>
    %199 = arith.select %10, %196, %198 : vector<1x128xi1>, vector<1x128xf32>
    %200 = math.tanh %199 : vector<1x128xf32>
    %cst_60 = arith.constant 5.000000e-01 : f32
    %201 = vector.broadcast %cst_60 : f32 to vector<1x128xf32>
    %202 = arith.mulf %201, %200 : vector<1x128xf32>
    %cst_61 = arith.constant 5.000000e-01 : f32
    %203 = vector.broadcast %cst_61 : f32 to vector<1x128xf32>
    %204 = arith.addf %202, %203 : vector<1x128xf32>
    %205 = vector.extract_strided_slice %204 {offsets = [0, 0], sizes = [1, 32], strides = [1, 1]} : vector<1x128xf32> to vector<1x32xf32>
    %206 = vector.extract_strided_slice %204 {offsets = [0, 32], sizes = [1, 32], strides = [1, 1]} : vector<1x128xf32> to vector<1x32xf32>
    %207 = vector.extract_strided_slice %200 {offsets = [0, 64], sizes = [1, 32], strides = [1, 1]} : vector<1x128xf32> to vector<1x32xf32>
    %208 = vector.extract_strided_slice %204 {offsets = [0, 96], sizes = [1, 32], strides = [1, 1]} : vector<1x128xf32> to vector<1x32xf32>
    %209 = arith.mulf %206, %168 : vector<1x32xf32>
    %210 = arith.mulf %205, %207 : vector<1x32xf32>
    %211 = arith.addf %209, %210 : vector<1x32xf32>
    %212 = math.tanh %211 : vector<1x32xf32>
    %213 = arith.mulf %208, %212 : vector<1x32xf32>
    %214 = tpu.concatenate %213, %191 in 1 : vector<1x32xf32>, vector<1x32xf32> -> vector<1x64xf32>
    %215 = arith.truncf %214 : vector<1x64xf32> to vector<1x64xbf16>
    %cst_62 = arith.constant dense<0.000000e+00> : vector<1x128xf32>
    %216 = tpu.matmul %215, %1, %cst_62 {dimension_numbers = #tpu.dot_dimension_numbers<[1], [0], [0], [1], [0, 0, 1, 1], [], []>} : vector<1x64xbf16>, vector<64x128xbf16>, vector<1x128xf32> -> vector<1x128xf32>
    %217 = arith.addf %216, %4 : vector<1x128xf32>
    %cst_63 = arith.constant 5.000000e-01 : f32
    %218 = vector.broadcast %cst_63 : f32 to vector<1x128xf32>
    %219 = arith.mulf %218, %217 : vector<1x128xf32>
    %220 = arith.select %10, %217, %219 : vector<1x128xi1>, vector<1x128xf32>
    %221 = math.tanh %220 : vector<1x128xf32>
    %cst_64 = arith.constant 5.000000e-01 : f32
    %222 = vector.broadcast %cst_64 : f32 to vector<1x128xf32>
    %223 = arith.mulf %222, %221 : vector<1x128xf32>
    %cst_65 = arith.constant 5.000000e-01 : f32
    %224 = vector.broadcast %cst_65 : f32 to vector<1x128xf32>
    %225 = arith.addf %223, %224 : vector<1x128xf32>
    %226 = vector.extract_strided_slice %225 {offsets = [0, 0], sizes = [1, 32], strides = [1, 1]} : vector<1x128xf32> to vector<1x32xf32>
    %227 = vector.extract_strided_slice %225 {offsets = [0, 32], sizes = [1, 32], strides = [1, 1]} : vector<1x128xf32> to vector<1x32xf32>
    %228 = vector.extract_strided_slice %221 {offsets = [0, 64], sizes = [1, 32], strides = [1, 1]} : vector<1x128xf32> to vector<1x32xf32>
    %229 = vector.extract_strided_slice %225 {offsets = [0, 96], sizes = [1, 32], strides = [1, 1]} : vector<1x128xf32> to vector<1x32xf32>
    %230 = arith.mulf %227, %189 : vector<1x32xf32>
    %231 = arith.mulf %226, %228 : vector<1x32xf32>
    %232 = arith.addf %230, %231 : vector<1x32xf32>
    %233 = math.tanh %232 : vector<1x32xf32>
    %234 = arith.mulf %229, %233 : vector<1x32xf32>
    %c4 = arith.constant 4 : index
    %c0_66 = arith.constant 0 : index
    %235 = vector.load %arg13[%c4, %c0_66] : memref<8x32xf32, #tpu.memory_space<vmem>>, vector<1x32xf32>
    tpu.vector_store %arg13[%c4, %c0_66], %234 {strides = array<i32>} : memref<8x32xf32, #tpu.memory_space<vmem>>, vector<1x32xf32>,
    %236 = vector.extract_strided_slice %16 {offsets = [5, 0], sizes = [1, 128], strides = [1, 1]} : vector<8x128xf32> to vector<1x128xf32>
    %237 = arith.truncf %213 : vector<1x32xf32> to vector<1x32xbf16>
    %cst_67 = arith.constant dense<0.000000e+00> : vector<1x128xf32>
    %238 = tpu.matmul %237, %0, %cst_67 {dimension_numbers = #tpu.dot_dimension_numbers<[1], [0], [0], [1], [0, 0, 1, 1], [], []>} : vector<1x32xbf16>, vector<32x128xbf16>, vector<1x128xf32> -> vector<1x128xf32>
    %239 = arith.addf %236, %238 : vector<1x128xf32>
    %cst_68 = arith.constant 5.000000e-01 : f32
    %240 = vector.broadcast %cst_68 : f32 to vector<1x128xf32>
    %241 = arith.mulf %240, %239 : vector<1x128xf32>
    %242 = arith.select %10, %239, %241 : vector<1x128xi1>, vector<1x128xf32>
    %243 = math.tanh %242 : vector<1x128xf32>
    %cst_69 = arith.constant 5.000000e-01 : f32
    %244 = vector.broadcast %cst_69 : f32 to vector<1x128xf32>
    %245 = arith.mulf %244, %243 : vector<1x128xf32>
    %cst_70 = arith.constant 5.000000e-01 : f32
    %246 = vector.broadcast %cst_70 : f32 to vector<1x128xf32>
    %247 = arith.addf %245, %246 : vector<1x128xf32>
    %248 = vector.extract_strided_slice %247 {offsets = [0, 0], sizes = [1, 32], strides = [1, 1]} : vector<1x128xf32> to vector<1x32xf32>
    %249 = vector.extract_strided_slice %247 {offsets = [0, 32], sizes = [1, 32], strides = [1, 1]} : vector<1x128xf32> to vector<1x32xf32>
    %250 = vector.extract_strided_slice %243 {offsets = [0, 64], sizes = [1, 32], strides = [1, 1]} : vector<1x128xf32> to vector<1x32xf32>
    %251 = vector.extract_strided_slice %247 {offsets = [0, 96], sizes = [1, 32], strides = [1, 1]} : vector<1x128xf32> to vector<1x32xf32>
    %252 = arith.mulf %249, %211 : vector<1x32xf32>
    %253 = arith.mulf %248, %250 : vector<1x32xf32>
    %254 = arith.addf %252, %253 : vector<1x32xf32>
    %255 = math.tanh %254 : vector<1x32xf32>
    %256 = arith.mulf %251, %255 : vector<1x32xf32>
    %257 = tpu.concatenate %256, %234 in 1 : vector<1x32xf32>, vector<1x32xf32> -> vector<1x64xf32>
    %258 = arith.truncf %257 : vector<1x64xf32> to vector<1x64xbf16>
    %cst_71 = arith.constant dense<0.000000e+00> : vector<1x128xf32>
    %259 = tpu.matmul %258, %1, %cst_71 {dimension_numbers = #tpu.dot_dimension_numbers<[1], [0], [0], [1], [0, 0, 1, 1], [], []>} : vector<1x64xbf16>, vector<64x128xbf16>, vector<1x128xf32> -> vector<1x128xf32>
    %260 = arith.addf %259, %4 : vector<1x128xf32>
    %cst_72 = arith.constant 5.000000e-01 : f32
    %261 = vector.broadcast %cst_72 : f32 to vector<1x128xf32>
    %262 = arith.mulf %261, %260 : vector<1x128xf32>
    %263 = arith.select %10, %260, %262 : vector<1x128xi1>, vector<1x128xf32>
    %264 = math.tanh %263 : vector<1x128xf32>
    %cst_73 = arith.constant 5.000000e-01 : f32
    %265 = vector.broadcast %cst_73 : f32 to vector<1x128xf32>
    %266 = arith.mulf %265, %264 : vector<1x128xf32>
    %cst_74 = arith.constant 5.000000e-01 : f32
    %267 = vector.broadcast %cst_74 : f32 to vector<1x128xf32>
    %268 = arith.addf %266, %267 : vector<1x128xf32>
    %269 = vector.extract_strided_slice %268 {offsets = [0, 0], sizes = [1, 32], strides = [1, 1]} : vector<1x128xf32> to vector<1x32xf32>
    %270 = vector.extract_strided_slice %268 {offsets = [0, 32], sizes = [1, 32], strides = [1, 1]} : vector<1x128xf32> to vector<1x32xf32>
    %271 = vector.extract_strided_slice %264 {offsets = [0, 64], sizes = [1, 32], strides = [1, 1]} : vector<1x128xf32> to vector<1x32xf32>
    %272 = vector.extract_strided_slice %268 {offsets = [0, 96], sizes = [1, 32], strides = [1, 1]} : vector<1x128xf32> to vector<1x32xf32>
    %273 = arith.mulf %270, %232 : vector<1x32xf32>
    %274 = arith.mulf %269, %271 : vector<1x32xf32>
    %275 = arith.addf %273, %274 : vector<1x32xf32>
    %276 = math.tanh %275 : vector<1x32xf32>
    %277 = arith.mulf %272, %276 : vector<1x32xf32>
    %c5 = arith.constant 5 : index
    %c0_75 = arith.constant 0 : index
    %278 = vector.load %arg13[%c5, %c0_75] : memref<8x32xf32, #tpu.memory_space<vmem>>, vector<1x32xf32>
    tpu.vector_store %arg13[%c5, %c0_75], %277 {strides = array<i32>} : memref<8x32xf32, #tpu.memory_space<vmem>>, vector<1x32xf32>,
    %279 = vector.extract_strided_slice %16 {offsets = [6, 0], sizes = [1, 128], strides = [1, 1]} : vector<8x128xf32> to vector<1x128xf32>
    %280 = arith.truncf %256 : vector<1x32xf32> to vector<1x32xbf16>
    %cst_76 = arith.constant dense<0.000000e+00> : vector<1x128xf32>
    %281 = tpu.matmul %280, %0, %cst_76 {dimension_numbers = #tpu.dot_dimension_numbers<[1], [0], [0], [1], [0, 0, 1, 1], [], []>} : vector<1x32xbf16>, vector<32x128xbf16>, vector<1x128xf32> -> vector<1x128xf32>
    %282 = arith.addf %279, %281 : vector<1x128xf32>
    %cst_77 = arith.constant 5.000000e-01 : f32
    %283 = vector.broadcast %cst_77 : f32 to vector<1x128xf32>
    %284 = arith.mulf %283, %282 : vector<1x128xf32>
    %285 = arith.select %10, %282, %284 : vector<1x128xi1>, vector<1x128xf32>
    %286 = math.tanh %285 : vector<1x128xf32>
    %cst_78 = arith.constant 5.000000e-01 : f32
    %287 = vector.broadcast %cst_78 : f32 to vector<1x128xf32>
    %288 = arith.mulf %287, %286 : vector<1x128xf32>
    %cst_79 = arith.constant 5.000000e-01 : f32
    %289 = vector.broadcast %cst_79 : f32 to vector<1x128xf32>
    %290 = arith.addf %288, %289 : vector<1x128xf32>
    %291 = vector.extract_strided_slice %290 {offsets = [0, 0], sizes = [1, 32], strides = [1, 1]} : vector<1x128xf32> to vector<1x32xf32>
    %292 = vector.extract_strided_slice %290 {offsets = [0, 32], sizes = [1, 32], strides = [1, 1]} : vector<1x128xf32> to vector<1x32xf32>
    %293 = vector.extract_strided_slice %286 {offsets = [0, 64], sizes = [1, 32], strides = [1, 1]} : vector<1x128xf32> to vector<1x32xf32>
    %294 = vector.extract_strided_slice %290 {offsets = [0, 96], sizes = [1, 32], strides = [1, 1]} : vector<1x128xf32> to vector<1x32xf32>
    %295 = arith.mulf %292, %254 : vector<1x32xf32>
    %296 = arith.mulf %291, %293 : vector<1x32xf32>
    %297 = arith.addf %295, %296 : vector<1x32xf32>
    %298 = math.tanh %297 : vector<1x32xf32>
    %299 = arith.mulf %294, %298 : vector<1x32xf32>
    %300 = tpu.concatenate %299, %277 in 1 : vector<1x32xf32>, vector<1x32xf32> -> vector<1x64xf32>
    %301 = arith.truncf %300 : vector<1x64xf32> to vector<1x64xbf16>
    %cst_80 = arith.constant dense<0.000000e+00> : vector<1x128xf32>
    %302 = tpu.matmul %301, %1, %cst_80 {dimension_numbers = #tpu.dot_dimension_numbers<[1], [0], [0], [1], [0, 0, 1, 1], [], []>} : vector<1x64xbf16>, vector<64x128xbf16>, vector<1x128xf32> -> vector<1x128xf32>
    %303 = arith.addf %302, %4 : vector<1x128xf32>
    %cst_81 = arith.constant 5.000000e-01 : f32
    %304 = vector.broadcast %cst_81 : f32 to vector<1x128xf32>
    %305 = arith.mulf %304, %303 : vector<1x128xf32>
    %306 = arith.select %10, %303, %305 : vector<1x128xi1>, vector<1x128xf32>
    %307 = math.tanh %306 : vector<1x128xf32>
    %cst_82 = arith.constant 5.000000e-01 : f32
    %308 = vector.broadcast %cst_82 : f32 to vector<1x128xf32>
    %309 = arith.mulf %308, %307 : vector<1x128xf32>
    %cst_83 = arith.constant 5.000000e-01 : f32
    %310 = vector.broadcast %cst_83 : f32 to vector<1x128xf32>
    %311 = arith.addf %309, %310 : vector<1x128xf32>
    %312 = vector.extract_strided_slice %311 {offsets = [0, 0], sizes = [1, 32], strides = [1, 1]} : vector<1x128xf32> to vector<1x32xf32>
    %313 = vector.extract_strided_slice %311 {offsets = [0, 32], sizes = [1, 32], strides = [1, 1]} : vector<1x128xf32> to vector<1x32xf32>
    %314 = vector.extract_strided_slice %307 {offsets = [0, 64], sizes = [1, 32], strides = [1, 1]} : vector<1x128xf32> to vector<1x32xf32>
    %315 = vector.extract_strided_slice %311 {offsets = [0, 96], sizes = [1, 32], strides = [1, 1]} : vector<1x128xf32> to vector<1x32xf32>
    %316 = arith.mulf %313, %275 : vector<1x32xf32>
    %317 = arith.mulf %312, %314 : vector<1x32xf32>
    %318 = arith.addf %316, %317 : vector<1x32xf32>
    %319 = math.tanh %318 : vector<1x32xf32>
    %320 = arith.mulf %315, %319 : vector<1x32xf32>
    %c6 = arith.constant 6 : index
    %c0_84 = arith.constant 0 : index
    %321 = vector.load %arg13[%c6, %c0_84] : memref<8x32xf32, #tpu.memory_space<vmem>>, vector<1x32xf32>
    tpu.vector_store %arg13[%c6, %c0_84], %320 {strides = array<i32>} : memref<8x32xf32, #tpu.memory_space<vmem>>, vector<1x32xf32>,
    %322 = vector.extract_strided_slice %16 {offsets = [7, 0], sizes = [1, 128], strides = [1, 1]} : vector<8x128xf32> to vector<1x128xf32>
    %323 = arith.truncf %299 : vector<1x32xf32> to vector<1x32xbf16>
    %cst_85 = arith.constant dense<0.000000e+00> : vector<1x128xf32>
    %324 = tpu.matmul %323, %0, %cst_85 {dimension_numbers = #tpu.dot_dimension_numbers<[1], [0], [0], [1], [0, 0, 1, 1], [], []>} : vector<1x32xbf16>, vector<32x128xbf16>, vector<1x128xf32> -> vector<1x128xf32>
    %325 = arith.addf %322, %324 : vector<1x128xf32>
    %cst_86 = arith.constant 5.000000e-01 : f32
    %326 = vector.broadcast %cst_86 : f32 to vector<1x128xf32>
    %327 = arith.mulf %326, %325 : vector<1x128xf32>
    %328 = arith.select %10, %325, %327 : vector<1x128xi1>, vector<1x128xf32>
    %329 = math.tanh %328 : vector<1x128xf32>
    %cst_87 = arith.constant 5.000000e-01 : f32
    %330 = vector.broadcast %cst_87 : f32 to vector<1x128xf32>
    %331 = arith.mulf %330, %329 : vector<1x128xf32>
    %cst_88 = arith.constant 5.000000e-01 : f32
    %332 = vector.broadcast %cst_88 : f32 to vector<1x128xf32>
    %333 = arith.addf %331, %332 : vector<1x128xf32>
    %334 = vector.extract_strided_slice %333 {offsets = [0, 0], sizes = [1, 32], strides = [1, 1]} : vector<1x128xf32> to vector<1x32xf32>
    %335 = vector.extract_strided_slice %333 {offsets = [0, 32], sizes = [1, 32], strides = [1, 1]} : vector<1x128xf32> to vector<1x32xf32>
    %336 = vector.extract_strided_slice %329 {offsets = [0, 64], sizes = [1, 32], strides = [1, 1]} : vector<1x128xf32> to vector<1x32xf32>
    %337 = vector.extract_strided_slice %333 {offsets = [0, 96], sizes = [1, 32], strides = [1, 1]} : vector<1x128xf32> to vector<1x32xf32>
    %338 = arith.mulf %335, %297 : vector<1x32xf32>
    %339 = arith.mulf %334, %336 : vector<1x32xf32>
    %340 = arith.addf %338, %339 : vector<1x32xf32>
    %341 = math.tanh %340 : vector<1x32xf32>
    %342 = arith.mulf %337, %341 : vector<1x32xf32>
    %343 = tpu.concatenate %342, %320 in 1 : vector<1x32xf32>, vector<1x32xf32> -> vector<1x64xf32>
    %344 = arith.truncf %343 : vector<1x64xf32> to vector<1x64xbf16>
    %cst_89 = arith.constant dense<0.000000e+00> : vector<1x128xf32>
    %345 = tpu.matmul %344, %1, %cst_89 {dimension_numbers = #tpu.dot_dimension_numbers<[1], [0], [0], [1], [0, 0, 1, 1], [], []>} : vector<1x64xbf16>, vector<64x128xbf16>, vector<1x128xf32> -> vector<1x128xf32>
    %346 = arith.addf %345, %4 : vector<1x128xf32>
    %cst_90 = arith.constant 5.000000e-01 : f32
    %347 = vector.broadcast %cst_90 : f32 to vector<1x128xf32>
    %348 = arith.mulf %347, %346 : vector<1x128xf32>
    %349 = arith.select %10, %346, %348 : vector<1x128xi1>, vector<1x128xf32>
    %350 = math.tanh %349 : vector<1x128xf32>
    %cst_91 = arith.constant 5.000000e-01 : f32
    %351 = vector.broadcast %cst_91 : f32 to vector<1x128xf32>
    %352 = arith.mulf %351, %350 : vector<1x128xf32>
    %cst_92 = arith.constant 5.000000e-01 : f32
    %353 = vector.broadcast %cst_92 : f32 to vector<1x128xf32>
    %354 = arith.addf %352, %353 : vector<1x128xf32>
    %355 = vector.extract_strided_slice %354 {offsets = [0, 0], sizes = [1, 32], strides = [1, 1]} : vector<1x128xf32> to vector<1x32xf32>
    %356 = vector.extract_strided_slice %354 {offsets = [0, 32], sizes = [1, 32], strides = [1, 1]} : vector<1x128xf32> to vector<1x32xf32>
    %357 = vector.extract_strided_slice %350 {offsets = [0, 64], sizes = [1, 32], strides = [1, 1]} : vector<1x128xf32> to vector<1x32xf32>
    %358 = vector.extract_strided_slice %354 {offsets = [0, 96], sizes = [1, 32], strides = [1, 1]} : vector<1x128xf32> to vector<1x32xf32>
    %359 = arith.mulf %356, %318 : vector<1x32xf32>
    %360 = arith.mulf %355, %357 : vector<1x32xf32>
    %361 = arith.addf %359, %360 : vector<1x32xf32>
    %362 = math.tanh %361 : vector<1x32xf32>
    %363 = arith.mulf %358, %362 : vector<1x32xf32>
    %c7 = arith.constant 7 : index
    %c0_93 = arith.constant 0 : index
    %364 = vector.load %arg13[%c7, %c0_93] : memref<8x32xf32, #tpu.memory_space<vmem>>, vector<1x32xf32>
    tpu.vector_store %arg13[%c7, %c0_93], %363 {strides = array<i32>} : memref<8x32xf32, #tpu.memory_space<vmem>>, vector<1x32xf32>,
    %c0_94 = arith.constant 0 : index
    %c0_95 = arith.constant 0 : index
    %365 = vector.load %arg11[%c0_94, %c0_95] : memref<2x32xf32, #tpu.memory_space<vmem>>, vector<1x32xf32>
    tpu.vector_store %arg11[%c0_94, %c0_95], %342 {strides = array<i32>} : memref<2x32xf32, #tpu.memory_space<vmem>>, vector<1x32xf32>,
    %c0_96 = arith.constant 0 : index
    %c0_97 = arith.constant 0 : index
    %366 = vector.load %arg12[%c0_96, %c0_97] : memref<2x32xf32, #tpu.memory_space<vmem>>, vector<1x32xf32>
    tpu.vector_store %arg12[%c0_96, %c0_97], %340 {strides = array<i32>} : memref<2x32xf32, #tpu.memory_space<vmem>>, vector<1x32xf32>,
    %c1_98 = arith.constant 1 : index
    %c0_99 = arith.constant 0 : index
    %367 = vector.load %arg11[%c1_98, %c0_99] : memref<2x32xf32, #tpu.memory_space<vmem>>, vector<1x32xf32>
    tpu.vector_store %arg11[%c1_98, %c0_99], %363 {strides = array<i32>} : memref<2x32xf32, #tpu.memory_space<vmem>>, vector<1x32xf32>,
    %c1_100 = arith.constant 1 : index
    %c0_101 = arith.constant 0 : index
    %368 = vector.load %arg12[%c1_100, %c0_101] : memref<2x32xf32, #tpu.memory_space<vmem>>, vector<1x32xf32>
    tpu.vector_store %arg12[%c1_100, %c0_101], %361 {strides = array<i32>} : memref<2x32xf32, #tpu.memory_space<vmem>>, vector<1x32xf32>,
    %c0_102 = arith.constant 0 : index
    %c0_103 = arith.constant 0 : index
    %369 = vector.load %arg13[%c0_102, %c0_103] : memref<8x32xf32, #tpu.memory_space<vmem>>, vector<8x32xf32>
    %370 = arith.truncf %369 : vector<8x32xf32> to vector<8x32xbf16>
    %cst_104 = arith.constant dense<0.000000e+00> : vector<8x32xf32>
    %371 = tpu.matmul %370, %2, %cst_104 {dimension_numbers = #tpu.dot_dimension_numbers<[1], [0], [0], [1], [0, 0, 1, 1], [], []>} : vector<8x32xbf16>, vector<32x32xbf16>, vector<8x32xf32> -> vector<8x32xf32>
    %c0_105 = arith.constant 0 : index
    %c0_106 = arith.constant 0 : index
    %372 = vector.load %arg9[%c0_105, %c0_106] : memref<1x32xf32, #tpu.memory_space<vmem>>, vector<1x32xf32>
    %373 = vector.broadcast %372 : vector<1x32xf32> to vector<8x32xf32>
    %374 = arith.addf %371, %373 : vector<8x32xf32>
    %cst_107 = arith.constant 1.000000e+00 : f32
    %375 = vector.broadcast %cst_107 : f32 to vector<8x32xf32>
    %376 = arith.mulf %374, %375 : vector<8x32xf32>
    %cst_108 = arith.constant dense<0xFF800000> : vector<8xf32>
    %377 = vector.multi_reduction <maximumf>, %376, %cst_108 [1] : vector<8x32xf32> to vector<8xf32>
    %378 = vector.shape_cast %377 : vector<8xf32> to vector<8x1xf32>
    %379 = vector.broadcast %378 : vector<8x1xf32> to vector<8x32xf32>
    %380 = arith.subf %376, %379 : vector<8x32xf32>
    %381 = math.exp %380 : vector<8x32xf32>
    %cst_109 = arith.constant dense<0.000000e+00> : vector<8xf32>
    %382 = vector.multi_reduction <add>, %381, %cst_109 [1] : vector<8x32xf32> to vector<8xf32>
    %383 = vector.shape_cast %382 : vector<8xf32> to vector<8x1xf32>
    %384 = math.log %383 : vector<8x1xf32>
    %385 = vector.broadcast %384 : vector<8x1xf32> to vector<8x32xf32>
    %386 = arith.subf %380, %385 : vector<8x32xf32>
    %c0_110 = arith.constant 0 : index
    %c0_111 = arith.constant 0 : index
    %387 = vector.load %arg10[%c0_110, %c0_111] : memref<8x32xf32, #tpu.memory_space<vmem>>, vector<8x32xf32>
    tpu.vector_store %arg10[%c0_110, %c0_111], %386 {strides = array<i32>} : memref<8x32xf32, #tpu.memory_space<vmem>>, vector<8x32xf32>,
    return
  }
}

</mosaic_0001>

<llo_original>
// kernel: lstm_forward.1
$region0: #{lstm_forward.1}
  #allocation0 [shape = 'u32[]', space=smem, size = 0x4, offset = 0x4, fixed_abs, tag = 'smem constant byte address 0x4 - core index']
  #allocation1 [shape = 'u32[72,128]{1,0:T(1,128)}', space=vmem, size = 0x9000, scoped, tag = 'internal scratch']
  #allocation2 [shape = 'f32[8,32]{1,0:T(8,128)}', space=vmem, size = 0x1000, scoped, tag = 'scratch operand']
  %s0 = inlined_call_operand.vmem [shape: f32[8,32], index: 0, kind: input, shape index: {}]
  %s1 = inlined_call_operand.vmem [shape: f32[2,32], index: 1, kind: input, shape index: {}, may-alias: {1,11}]
  %s2 = inlined_call_operand.vmem [shape: f32[2,32], index: 2, kind: input, shape index: {}, may-alias: {2,12}]
  %s3 = inlined_call_operand.hbm [shape: bf16[32,128], index: 3, kind: input, shape index: {}]
  %s4 = inlined_call_operand.hbm [shape: bf16[32,128], index: 4, kind: input, shape index: {}]
  %s5 = inlined_call_operand.vmem [shape: f32[1,128], index: 5, kind: input, shape index: {}]
  %s6 = inlined_call_operand.hbm [shape: bf16[64,128], index: 6, kind: input, shape index: {}]
  %s7 = inlined_call_operand.vmem [shape: f32[1,128], index: 7, kind: input, shape index: {}]
  %s8 = inlined_call_operand.hbm [shape: bf16[32,32], index: 8, kind: input, shape index: {}]
  %s9 = inlined_call_operand.vmem [shape: f32[1,32], index: 9, kind: input, shape index: {}]
  %s10 = inlined_call_operand.hbm [shape: f32[8,32], index: 10, kind: output, shape index: {0}]
  %s11 = inlined_call_operand.vmem [shape: f32[2,32], index: 11, kind: output, shape index: {1}, may-alias: {1,11}]
  %s12 = inlined_call_operand.vmem [shape: f32[2,32], index: 12, kind: output, shape index: {2}, may-alias: {2,12}]
  %13 = xla_tuple %s10, %s11, %s12
  %s14 = sld [smem:[#allocation0]]
  $region82: #{lstm_forward.1} parent=0
    _
  %s16 = ssub.s32 1, %s14
  %s17 = scalar_select 0, %s16, %s14
  $region1: #{lstm_forward.1} parent=0
    #allocation3 [shape = 'u8[8192]{0}', space=vmem, size = 0x2000, scoped, tag = 'input window, operand 3, single buffered']
    #allocation4 [shape = 's32[1]{0}', space=sflag, size = 0x4, scoped, tag = 'scoped memory for lstm_forward.1']
    #allocation5 [shape = 's32[1]{0}', space=sflag, size = 0x4, scoped, tag = 'scoped memory for lstm_forward.1']
    #allocation6 [shape = 'u8[8192]{0}', space=vmem, size = 0x2000, scoped, tag = 'input window, operand 4, single buffered']
    #allocation7 [shape = 's32[1]{0}', space=sflag, size = 0x4, scoped, tag = 'scoped memory for lstm_forward.1']
    #allocation8 [shape = 'u8[16384]{0}', space=vmem, size = 0x4000, scoped, tag = 'input window, operand 6, single buffered']
    #allocation9 [shape = 'u8[8192]{0}', space=vmem, size = 0x2000, scoped, tag = 'input window, operand 8, single buffered']
    #allocation10 [shape = 's32[1]{0}', space=sflag, size = 0x4, scoped, tag = 'scoped memory for lstm_forward.1']
    #allocation11 [shape = 'u8[4096]{0}', space=vmem, size = 0x1000, scoped, tag = 'output window, operand 0, single buffered']
    %18 = vsyncpa [#allocation4], 0
    %19 = vsyncpa [#allocation7], 0
    %20 = vsyncpa [#allocation10], 0
    %21 = vsyncpa [#allocation5], 0
    // Predicated region
    $region2: #{lstm_forward.1} parent=1 // pred_check
      _
    $region3: #{lstm_forward.1} parent=1 // pred_check_branch
      %23 = sbr.rel (0) target = $region5
    $region4: #{lstm_forward.1} parent=1 // pred_region
      _
    $region5: #{lstm_forward.1} parent=1 // pred_fallthru
      _
    // Predicated region
    $region6: #{lstm_forward.1} parent=1 // pred_check
      _
    $region7: #{lstm_forward.1} parent=1 // pred_check_branch
      %25 = sbr.rel (0) target = $region9
    $region8: #{lstm_forward.1} parent=1 // pred_region
      _
    $region9: #{lstm_forward.1} parent=1 // pred_fallthru
      _
    // Predicated region
    $region10: #{lstm_forward.1} parent=1 // pred_check
      _
    $region11: #{lstm_forward.1} parent=1 // pred_check_branch
      %27 = sbr.rel (0) target = $region13
    $region12: #{lstm_forward.1} parent=1 // pred_region
      _
    $region13: #{lstm_forward.1} parent=1 // pred_fallthru
      _
    // Predicated region
    $region14: #{lstm_forward.1} parent=1 // pred_check
      _
    $region15: #{lstm_forward.1} parent=1 // pred_check_branch
      %29 = sbr.rel (0) target = $region17
    $region16: #{lstm_forward.1} parent=1 // pred_region
      %31 = vsyncadd [#allocation4], 0
      %s32 = sshll.u32 %s3, 4
      %s33 = int_to_ptr.hbm [resolvable:$true] %s32
      %s34 = sshll.u32 [#allocation3], 4
      %s35 = int_to_ptr.vmem [resolvable:$true] %s34
      %40 = dma.hbm_to_vmem [thread:$0]  %s33, 256, %s35, [#allocation4], 64, 64, 4
    $region17: #{lstm_forward.1} parent=1 // pred_fallthru
      _
    // Predicated region
    $region18: #{lstm_forward.1} parent=1 // pred_check
      _
    $region19: #{lstm_forward.1} parent=1 // pred_check_branch
      %42 = sbr.rel (0) target = $region21
    $region20: #{lstm_forward.1} parent=1 // pred_region
      %44 = vsyncadd [#allocation7], 0
      %s45 = sshll.u32 %s4, 4
      %s46 = int_to_ptr.hbm [resolvable:$true] %s45
      %s47 = sshll.u32 [#allocation6], 4
      %s48 = int_to_ptr.vmem [resolvable:$true] %s47
      %53 = dma.hbm_to_vmem [thread:$0]  %s46, 256, %s48, [#allocation7], 64, 64, 4
    $region21: #{lstm_forward.1} parent=1 // pred_fallthru
      _
    // Predicated region
    $region22: #{lstm_forward.1} parent=1 // pred_check
      _
    $region23: #{lstm_forward.1} parent=1 // pred_check_branch
      %55 = sbr.rel (0) target = $region25
    $region24: #{lstm_forward.1} parent=1 // pred_region
      _
    $region25: #{lstm_forward.1} parent=1 // pred_fallthru
      _
    // Predicated region
    $region26: #{lstm_forward.1} parent=1 // pred_check
      _
    $region27: #{lstm_forward.1} parent=1 // pred_check_branch
      %57 = sbr.rel (0) target = $region29
    $region28: #{lstm_forward.1} parent=1 // pred_region
      %59 = vsyncadd [#allocation7], 0
      %s60 = sshll.u32 %s6, 4
      %s61 = int_to_ptr.hbm [resolvable:$true] %s60
      %s62 = sshll.u32 [#allocation8], 4
      %s63 = int_to_ptr.vmem [resolvable:$true] %s62
      %68 = dma.hbm_to_vmem [thread:$0]  %s61, 512, %s63, [#allocation7], 64, 64, 4
    $region29: #{lstm_forward.1} parent=1 // pred_fallthru
      _
    // Predicated region
    $region30: #{lstm_forward.1} parent=1 // pred_check
      _
    $region31: #{lstm_forward.1} parent=1 // pred_check_branch
      %70 = sbr.rel (0) target = $region33
    $region32: #{lstm_forward.1} parent=1 // pred_region
      _
    $region33: #{lstm_forward.1} parent=1 // pred_fallthru
      _
    // Predicated region
    $region34: #{lstm_forward.1} parent=1 // pred_check
      _
    $region35: #{lstm_forward.1} parent=1 // pred_check_branch
      %72 = sbr.rel (0) target = $region37
    $region36: #{lstm_forward.1} parent=1 // pred_region
      %74 = vsyncadd [#allocation10], 0
      %s75 = sshll.u32 %s8, 4
      %s76 = int_to_ptr.hbm [resolvable:$true] %s75
      %s77 = sshll.u32 [#allocation9], 4
      %s78 = int_to_ptr.vmem [resolvable:$true] %s77
      %83 = dma.hbm_to_vmem [thread:$0]  %s76, 256, %s78, [#allocation10], 64, 64, 4
    $region37: #{lstm_forward.1} parent=1 // pred_fallthru
      _
    // Predicated region
    $region38: #{lstm_forward.1} parent=1 // pred_check
      _
    $region39: #{lstm_forward.1} parent=1 // pred_check_branch
      %85 = sbr.rel (0) target = $region41
    $region40: #{lstm_forward.1} parent=1 // pred_region
      _
    $region41: #{lstm_forward.1} parent=1 // pred_fallthru
      _
    // Predicated region
    $region42: #{lstm_forward.1} parent=1 // pred_check
      _
    $region43: #{lstm_forward.1} parent=1 // pred_check_branch
      %87 = sbr.rel (0) target = $region45
    $region44: #{lstm_forward.1} parent=1 // pred_region
      %89 = dma.done [#allocation4], 256
    $region45: #{lstm_forward.1} parent=1 // pred_fallthru
      _
    // Predicated region
    $region46: #{lstm_forward.1} parent=1 // pred_check
      _
    $region47: #{lstm_forward.1} parent=1 // pred_check_branch
      %91 = sbr.rel (0) target = $region49
    $region48: #{lstm_forward.1} parent=1 // pred_region
      %93 = dma.done [#allocation7], 256
    $region49: #{lstm_forward.1} parent=1 // pred_fallthru
      _
    // Predicated region
    $region50: #{lstm_forward.1} parent=1 // pred_check
      _
    $region51: #{lstm_forward.1} parent=1 // pred_check_branch
      %95 = sbr.rel (0) target = $region53
    $region52: #{lstm_forward.1} parent=1 // pred_region
      %97 = dma.done [#allocation7], 512
    $region53: #{lstm_forward.1} parent=1 // pred_fallthru
      _
    // Predicated region
    $region54: #{lstm_forward.1} parent=1 // pred_check
      _
    $region55: #{lstm_forward.1} parent=1 // pred_check_branch
      %99 = sbr.rel (0) target = $region57
    $region56: #{lstm_forward.1} parent=1 // pred_region
      %101 = dma.done [#allocation10], 256
    $region57: #{lstm_forward.1} parent=1 // pred_fallthru
      _
    %v103 = vld [vmem:[#allocation6] sm:$0xf]
    %v104 = vld [vmem:[#allocation6 + $0x4] sm:$0xf]
    %v105 = vld [vmem:[#allocation6 + $0x8] sm:$0xf]
    %v106 = vld [vmem:[#allocation6 + $0xc] sm:$0xf]
    %v107 = vld [vmem:[#allocation8] sm:$0xf]
    %v108 = vld [vmem:[#allocation8 + $0x4] sm:$0xf]
    %v109 = vld [vmem:[#allocation8 + $0x8] sm:$0xf]
    %v110 = vld [vmem:[#allocation8 + $0xc] sm:$0xf]
    %v111 = vld [vmem:[#allocation8 + $0x10] sm:$0xf]
    %v112 = vld [vmem:[#allocation8 + $0x14] sm:$0xf]
    %v113 = vld [vmem:[#allocation8 + $0x18] sm:$0xf]
    %v114 = vld [vmem:[#allocation8 + $0x1c] sm:$0xf]
    %v115 = vld [vmem:[#allocation9] sm:$0xf]
    %v116 = vld [vmem:[#allocation9 + $0x4] sm:$0xf]
    %v117 = vld [vmem:[#allocation9 + $0x8] sm:$0xf]
    %v118 = vld [vmem:[#allocation9 + $0xc] sm:$0xf]
    %v119 = vld [vmem:[%s5] sm:$0x1]
    %v120 = vld [vmem:[%s7] sm:$0x1]
    %v121 = vlaneseq
    %v122 = vand.u32 %v121, 127
    %vm123 = vcmp.ge.s32.totalorder %v122, 64
    %vm124 = vcmp.lt.s32.totalorder %v122, 96
    %vm125 = vmand %vm123, %vm124
    %v126 = vld [vmem:[%s0] sm:$0xff]
    %v127 = vpack.c.bf16 %v126, %v126
    %v128 = vld [vmem:[#allocation3] sm:$0xf]
    %v129 = vld [vmem:[#allocation3 + $0x4] sm:$0xf]
    %v130 = vld [vmem:[#allocation3 + $0x8] sm:$0xf]
    %v131 = vld [vmem:[#allocation3 + $0xc] sm:$0xf]
    %v133 = vperm.slane %v119, 0
    %v139 = vunpack.c.l.b16 %v128
    %v140 = vunpack.c.l.b16 %v129
    %v141 = vunpack.c.l.b16 %v130
    %v142 = vunpack.c.l.b16 %v131
    %v143 = vpack.c.b16 %v140, %v139
    %v144 = vpack.c.b16 %v142, %v141
    %vm147 = vcmask 261120
    %v149 = vsel %vm147, %v127, 0
    %151 = vmatpush.bf16.msra.mxu0 0
    %152 = vmatpush.bf16.msra.mxu0 0
    %153 = vmatpush.bf16.msra.mxu0 0
    %154 = vmatpush.bf16.msra.mxu0 0
    %155 = vmatpush.bf16.msra.mxu0 0
    %156 = vmatpush.bf16.msra.mxu0 0
    %157 = vmatpush.bf16.msra.mxu0 %v144
    %158 = vmatpush.bf16.msra.mxu0 %v143
    %159 = vmatmul.bf16.gmra.mxu0 %v149
    %v160 = vpop.f32.mrf.mxu0
    %v161 = vadd.f32 %v133, %v160
    %v162 = vpop.f32.mrf.mxu0
    %163 = vdwg.mxu0
    %v164 = vld [vmem:[%s1] sm:$0x1]
    %v165 = vld [vmem:[%s2] sm:$0x1]
    %v166 = vld [vmem:[%s1 + $0x1] sm:$0x1]
    %v167 = vld [vmem:[%s2 + $0x1] sm:$0x1]
    %v168 = vpack.c.bf16 %v164, %v164
    %v173 = vunpack.c.l.b16 %v103
    %v174 = vunpack.c.l.b16 %v104
    %v175 = vunpack.c.l.b16 %v105
    %v176 = vunpack.c.l.b16 %v106
    %v177 = vpack.c.b16 %v174, %v173
    %v178 = vpack.c.b16 %v176, %v175
    %v182 = vsel %vm147, %v168, 0
    %184 = vmatpush.bf16.msra.mxu0 0
    %185 = vmatpush.bf16.msra.mxu0 0
    %186 = vmatpush.bf16.msra.mxu0 0
    %187 = vmatpush.bf16.msra.mxu0 0
    %188 = vmatpush.bf16.msra.mxu0 0
    %189 = vmatpush.bf16.msra.mxu0 0
    %190 = vmatpush.bf16.msra.mxu0 %v178
    %191 = vmatpush.bf16.msra.mxu0 %v177
    %192 = vmatmul.bf16.gmra.mxu0 %v182
    %v193 = vpop.f32.mrf.mxu0
    %v194 = vadd.f32 0.0, %v193
    %v195 = vpop.f32.mrf.mxu0
    %196 = vdwg.mxu0
    %v197 = vadd.f32 %v161, %v194
    %v198 = vmul.f32 %v197, 0.5
    %v199 = vsel %vm125, %v197, %v198
    %v200 = vtanh.pop %v199
    %v201 = vmul.f32 %v200, 0.5
    %v202 = vadd.f32 %v201, 0.5
    %204 = vrot.lane.b32.xlu0 %v165, 32
    %v205 = vpop.permute.xlu0 %204
    %v207 = vmul.f32 %v202, %v205
    %209 = vrot.lane.b32.xlu0 %v200, 64
    %v210 = vpop.permute.xlu0 %209
    %v212 = vmul.f32 %v202, %v210
    %214 = vrot.lane.b32.xlu0 %v212, 32
    %v215 = vpop.permute.xlu0 %214
    %v217 = vadd.f32 %v207, %v215
    %v218 = vtanh.pop %v217
    %220 = vrot.lane.b32.xlu0 %v218, 64
    %v221 = vpop.permute.xlu0 %220
    %v223 = vmul.f32 %v202, %v221
    %225 = vrot.lane.b32.xlu0 %v223, 32
    %v226 = vpop.permute.xlu0 %225
    %229 = vrot.lane.b32.xlu0 %v166, 32
    %v230 = vpop.permute.xlu0 %229
    %v232 = vsel %vm147, %v226, %v230
    %v233 = vpack.c.bf16 %v232, %v232
    %v242 = vunpack.c.l.b16 %v107
    %v243 = vunpack.c.l.b16 %v108
    %v244 = vunpack.c.l.b16 %v109
    %v245 = vunpack.c.l.b16 %v110
    %v246 = vunpack.c.l.b16 %v111
    %v247 = vunpack.c.l.b16 %v112
    %v248 = vunpack.c.l.b16 %v113
    %v249 = vunpack.c.l.b16 %v114
    %v250 = vpack.c.b16 %v243, %v242
    %v251 = vpack.c.b16 %v245, %v244
    %v252 = vpack.c.b16 %v247, %v246
    %v253 = vpack.c.b16 %v249, %v248
    %vm258 = vcmask 523264
    %v260 = vsel %vm258, %v233, 0
    %262 = vmatpush.bf16.msra.mxu0 0
    %263 = vmatpush.bf16.msra.mxu0 0
    %264 = vmatpush.bf16.msra.mxu0 0
    %265 = vmatpush.bf16.msra.mxu0 0
    %266 = vmatpush.bf16.msra.mxu0 %v253
    %267 = vmatpush.bf16.msra.mxu0 %v252
    %268 = vmatpush.bf16.msra.mxu0 %v251
    %269 = vmatpush.bf16.msra.mxu0 %v250
    %270 = vmatmul.bf16.gmra.mxu0 %v260
    %v271 = vpop.f32.mrf.mxu0
    %v272 = vadd.f32 %v120, %v271
    %v273 = vpop.f32.mrf.mxu0
    %274 = vdwg.mxu0
    %v275 = vmul.f32 %v272, 0.5
    %v276 = vsel %vm125, %v272, %v275
    %v277 = vtanh.pop %v276
    %v278 = vmul.f32 %v277, 0.5
    %v279 = vadd.f32 %v278, 0.5
    %281 = vrot.lane.b32.xlu0 %v167, 32
    %v282 = vpop.permute.xlu0 %281
    %v284 = vmul.f32 %v279, %v282
    %286 = vrot.lane.b32.xlu0 %v277, 64
    %v287 = vpop.permute.xlu0 %286
    %v289 = vmul.f32 %v279, %v287
    %291 = vrot.lane.b32.xlu0 %v289, 32
    %v292 = vpop.permute.xlu0 %291
    %v294 = vadd.f32 %v284, %v292
    %v295 = vtanh.pop %v294
    %297 = vrot.lane.b32.xlu0 %v295, 64
    %v298 = vpop.permute.xlu0 %297
    %v300 = vmul.f32 %v279, %v298
    %302 = vrot.lane.b32.xlu0 %v300, 32
    %v303 = vpop.permute.xlu0 %302
    %vm305 = vcmask 253952
    %306 = vst.msk [vmem:[#allocation2] sm:$0x1] %vm305, %v303
    %v307 = vpack.c.bf16 %v223, %v223
    %309 = vrot.lane.b32.xlu0 %v307, 32
    %v310 = vpop.permute.xlu0 %309
    %v312 = vsel %vm147, %v310, 0
    %314 = vmatpush.bf16.msra.mxu0 0
    %315 = vmatpush.bf16.msra.mxu0 0
    %316 = vmatpush.bf16.msra.mxu0 0
    %317 = vmatpush.bf16.msra.mxu0 0
    %318 = vmatpush.bf16.msra.mxu0 0
    %319 = vmatpush.bf16.msra.mxu0 0
    %320 = vmatpush.bf16.msra.mxu0 %v178
    %321 = vmatpush.bf16.msra.mxu0 %v177
    %322 = vmatmul.bf16.gmra.mxu0 %v312
    %v323 = vpop.f32.mrf.mxu0
    %v324 = vadd.f32 0.0, %v323
    %v325 = vpop.f32.mrf.mxu0
    %326 = vdwg.mxu0
    %v328 = vrot.slane %v324, 7
    %v330 = vadd.f32 %v161, %v328
    %v331 = vmul.f32 %v330, 0.5
    %v332 = vsel %vm125, %v330, %v331
    %v333 = vtanh.pop %v332
    %v334 = vmul.f32 %v333, 0.5
    %v335 = vadd.f32 %v334, 0.5
    %v337 = vrot.slane %v217, 7
    %v339 = vmul.f32 %v335, %v337
    %341 = vrot.lane.b32.xlu0 %v333, 64
    %v342 = vpop.permute.xlu0 %341
    %v344 = vmul.f32 %v335, %v342
    %346 = vrot.lane.b32.xlu0 %v344, 32
    %v347 = vpop.permute.xlu0 %346
    %v349 = vadd.f32 %v339, %v347
    %v350 = vtanh.pop %v349
    %352 = vrot.lane.b32.xlu0 %v350, 64
    %v353 = vpop.permute.xlu0 %352
    %v355 = vmul.f32 %v335, %v353
    %357 = vrot.lane.b32.xlu0 %v355, 32
    %v358 = vpop.permute.xlu0 %357
    %v360 = vrot.slane %v300, 7
    %361 = vrot.lane.b32.xlu0 %v360, 64
    %v362 = vpop.permute.xlu0 %361
    %v364 = vsel %vm147, %v358, %v362
    %v365 = vpack.c.bf16 %v364, %v364
    %v367 = vshrl.u32 %v365, 16
    %v370 = vsel %vm258, %v367, 0
    %372 = vmatpush.bf16.msra.mxu0 0
    %373 = vmatpush.bf16.msra.mxu0 0
    %374 = vmatpush.bf16.msra.mxu0 0
    %375 = vmatpush.bf16.msra.mxu0 0
    %376 = vmatpush.bf16.msra.mxu0 %v253
    %377 = vmatpush.bf16.msra.mxu0 %v252
    %378 = vmatpush.bf16.msra.mxu0 %v251
    %379 = vmatpush.bf16.msra.mxu0 %v250
    %380 = vmatmul.bf16.gmra.mxu0 %v370
    %v381 = vpop.f32.mrf.mxu0
    %v382 = vadd.f32 %v120, %v381
    %v383 = vpop.f32.mrf.mxu0
    %384 = vdwg.mxu0
    %v385 = vmul.f32 %v382, 0.5
    %v386 = vsel %vm125, %v382, %v385
    %v387 = vtanh.pop %v386
    %v388 = vmul.f32 %v387, 0.5
    %v389 = vadd.f32 %v388, 0.5
    %v390 = vmul.f32 %v389, %v294
    %392 = vrot.lane.b32.xlu0 %v387, 64
    %v393 = vpop.permute.xlu0 %392
    %v395 = vmul.f32 %v389, %v393
    %397 = vrot.lane.b32.xlu0 %v395, 32
    %v398 = vpop.permute.xlu0 %397
    %v400 = vadd.f32 %v390, %v398
    %v401 = vtanh.pop %v400
    %403 = vrot.lane.b32.xlu0 %v401, 64
    %v404 = vpop.permute.xlu0 %403
    %v406 = vmul.f32 %v389, %v404
    %408 = vrot.lane.b32.xlu0 %v406, 32
    %v409 = vpop.permute.xlu0 %408
    %411 = vst.msk [vmem:[#allocation2 + $0x1] sm:$0x1] %vm305, %v409
    %v412 = vpack.c.bf16 %v355, %v355
    %v414 = vshrl.u32 %v412, 16
    %416 = vrot.lane.b32.xlu0 %v414, 32
    %v417 = vpop.permute.xlu0 %416
    %v419 = vsel %vm147, %v417, 0
    %421 = vmatpush.bf16.msra.mxu0 0
    %422 = vmatpush.bf16.msra.mxu0 0
    %423 = vmatpush.bf16.msra.mxu0 0
    %424 = vmatpush.bf16.msra.mxu0 0
    %425 = vmatpush.bf16.msra.mxu0 0
    %426 = vmatpush.bf16.msra.mxu0 0
    %427 = vmatpush.bf16.msra.mxu0 %v178
    %428 = vmatpush.bf16.msra.mxu0 %v177
    %429 = vmatmul.bf16.gmra.mxu0 %v419
    %v430 = vpop.f32.mrf.mxu0
    %v431 = vadd.f32 0.0, %v430
    %v432 = vpop.f32.mrf.mxu0
    %433 = vdwg.mxu0
    %v435 = vrot.slane %v431, 6
    %v437 = vadd.f32 %v161, %v435
    %v438 = vmul.f32 %v437, 0.5
    %v439 = vsel %vm125, %v437, %v438
    %v440 = vtanh.pop %v439
    %v441 = vmul.f32 %v440, 0.5
    %v442 = vadd.f32 %v441, 0.5
    %v444 = vrot.slane %v349, 7
    %v446 = vmul.f32 %v442, %v444
    %448 = vrot.lane.b32.xlu0 %v440, 64
    %v449 = vpop.permute.xlu0 %448
    %v451 = vmul.f32 %v442, %v449
    %453 = vrot.lane.b32.xlu0 %v451, 32
    %v454 = vpop.permute.xlu0 %453
    %v456 = vadd.f32 %v446, %v454
    %v457 = vtanh.pop %v456
    %459 = vrot.lane.b32.xlu0 %v457, 64
    %v460 = vpop.permute.xlu0 %459
    %v462 = vmul.f32 %v442, %v460
    %464 = vrot.lane.b32.xlu0 %v462, 32
    %v465 = vpop.permute.xlu0 %464
    %v467 = vrot.slane %v406, 6
    %468 = vrot.lane.b32.xlu0 %v467, 64
    %v469 = vpop.permute.xlu0 %468
    %v471 = vsel %vm147, %v465, %v469
    %v472 = vpack.c.bf16 %v471, %v471
    %v474 = vrot.slane %v472, 1
    %v476 = vsel %vm258, %v474, 0
    %478 = vmatpush.bf16.msra.mxu0 0
    %479 = vmatpush.bf16.msra.mxu0 0
    %480 = vmatpush.bf16.msra.mxu0 0
    %481 = vmatpush.bf16.msra.mxu0 0
    %482 = vmatpush.bf16.msra.mxu0 %v253
    %483 = vmatpush.bf16.msra.mxu0 %v252
    %484 = vmatpush.bf16.msra.mxu0 %v251
    %485 = vmatpush.bf16.msra.mxu0 %v250
    %486 = vmatmul.bf16.gmra.mxu0 %v476
    %v487 = vpop.f32.mrf.mxu0
    %v488 = vadd.f32 %v120, %v487
    %v489 = vpop.f32.mrf.mxu0
    %490 = vdwg.mxu0
    %v491 = vmul.f32 %v488, 0.5
    %v492 = vsel %vm125, %v488, %v491
    %v493 = vtanh.pop %v492
    %v494 = vmul.f32 %v493, 0.5
    %v495 = vadd.f32 %v494, 0.5
    %v496 = vmul.f32 %v495, %v400
    %498 = vrot.lane.b32.xlu0 %v493, 64
    %v499 = vpop.permute.xlu0 %498
    %v501 = vmul.f32 %v495, %v499
    %503 = vrot.lane.b32.xlu0 %v501, 32
    %v504 = vpop.permute.xlu0 %503
    %v506 = vadd.f32 %v496, %v504
    %v507 = vtanh.pop %v506
    %509 = vrot.lane.b32.xlu0 %v507, 64
    %v510 = vpop.permute.xlu0 %509
    %v512 = vmul.f32 %v495, %v510
    %514 = vrot.lane.b32.xlu0 %v512, 32
    %v515 = vpop.permute.xlu0 %514
    %517 = vst.msk [vmem:[#allocation2 + $0x2] sm:$0x1] %vm305, %v515
    %v518 = vpack.c.bf16 %v462, %v462
    %v520 = vrot.slane %v518, 1
    %521 = vrot.lane.b32.xlu0 %v520, 32
    %v522 = vpop.permute.xlu0 %521
    %v524 = vsel %vm147, %v522, 0
    %526 = vmatpush.bf16.msra.mxu0 0
    %527 = vmatpush.bf16.msra.mxu0 0
    %528 = vmatpush.bf16.msra.mxu0 0
    %529 = vmatpush.bf16.msra.mxu0 0
    %530 = vmatpush.bf16.msra.mxu0 0
    %531 = vmatpush.bf16.msra.mxu0 0
    %532 = vmatpush.bf16.msra.mxu0 %v178
    %533 = vmatpush.bf16.msra.mxu0 %v177
    %534 = vmatmul.bf16.gmra.mxu0 %v524
    %v535 = vpop.f32.mrf.mxu0
    %v536 = vadd.f32 0.0, %v535
    %v537 = vpop.f32.mrf.mxu0
    %538 = vdwg.mxu0
    %v540 = vrot.slane %v536, 5
    %v542 = vadd.f32 %v161, %v540
    %v543 = vmul.f32 %v542, 0.5
    %v544 = vsel %vm125, %v542, %v543
    %v545 = vtanh.pop %v544
    %v546 = vmul.f32 %v545, 0.5
    %v547 = vadd.f32 %v546, 0.5
    %v549 = vrot.slane %v456, 7
    %v551 = vmul.f32 %v547, %v549
    %553 = vrot.lane.b32.xlu0 %v545, 64
    %v554 = vpop.permute.xlu0 %553
    %v556 = vmul.f32 %v547, %v554
    %558 = vrot.lane.b32.xlu0 %v556, 32
    %v559 = vpop.permute.xlu0 %558
    %v561 = vadd.f32 %v551, %v559
    %v562 = vtanh.pop %v561
    %564 = vrot.lane.b32.xlu0 %v562, 64
    %v565 = vpop.permute.xlu0 %564
    %v567 = vmul.f32 %v547, %v565
    %569 = vrot.lane.b32.xlu0 %v567, 32
    %v570 = vpop.permute.xlu0 %569
    %v572 = vrot.slane %v512, 5
    %573 = vrot.lane.b32.xlu0 %v572, 64
    %v574 = vpop.permute.xlu0 %573
    %v576 = vsel %vm147, %v570, %v574
    %v577 = vpack.c.bf16 %v576, %v576
    %v579 = vshrl.u32 %v577, 16
    %v581 = vrot.slane %v579, 1
    %v583 = vsel %vm258, %v581, 0
    %585 = vmatpush.bf16.msra.mxu0 0
    %586 = vmatpush.bf16.msra.mxu0 0
    %587 = vmatpush.bf16.msra.mxu0 0
    %588 = vmatpush.bf16.msra.mxu0 0
    %589 = vmatpush.bf16.msra.mxu0 %v253
    %590 = vmatpush.bf16.msra.mxu0 %v252
    %591 = vmatpush.bf16.msra.mxu0 %v251
    %592 = vmatpush.bf16.msra.mxu0 %v250
    %593 = vmatmul.bf16.gmra.mxu0 %v583
    %v594 = vpop.f32.mrf.mxu0
    %v595 = vadd.f32 %v120, %v594
    %v596 = vpop.f32.mrf.mxu0
    %597 = vdwg.mxu0
    %v598 = vmul.f32 %v595, 0.5
    %v599 = vsel %vm125, %v595, %v598
    %v600 = vtanh.pop %v599
    %v601 = vmul.f32 %v600, 0.5
    %v602 = vadd.f32 %v601, 0.5
    %v603 = vmul.f32 %v602, %v506
    %605 = vrot.lane.b32.xlu0 %v600, 64
    %v606 = vpop.permute.xlu0 %605
    %v608 = vmul.f32 %v602, %v606
    %610 = vrot.lane.b32.xlu0 %v608, 32
    %v611 = vpop.permute.xlu0 %610
    %v613 = vadd.f32 %v603, %v611
    %v614 = vtanh.pop %v613
    %616 = vrot.lane.b32.xlu0 %v614, 64
    %v617 = vpop.permute.xlu0 %616
    %v619 = vmul.f32 %v602, %v617
    %621 = vrot.lane.b32.xlu0 %v619, 32
    %v622 = vpop.permute.xlu0 %621
    %624 = vst.msk [vmem:[#allocation2 + $0x3] sm:$0x1] %vm305, %v622
    %v625 = vpack.c.bf16 %v567, %v567
    %v627 = vshrl.u32 %v625, 16
    %v629 = vrot.slane %v627, 1
    %630 = vrot.lane.b32.xlu0 %v629, 32
    %v631 = vpop.permute.xlu0 %630
    %v633 = vsel %vm147, %v631, 0
    %635 = vmatpush.bf16.msra.mxu0 0
    %636 = vmatpush.bf16.msra.mxu0 0
    %637 = vmatpush.bf16.msra.mxu0 0
    %638 = vmatpush.bf16.msra.mxu0 0
    %639 = vmatpush.bf16.msra.mxu0 0
    %640 = vmatpush.bf16.msra.mxu0 0
    %641 = vmatpush.bf16.msra.mxu0 %v178
    %642 = vmatpush.bf16.msra.mxu0 %v177
    %643 = vmatmul.bf16.gmra.mxu0 %v633
    %v644 = vpop.f32.mrf.mxu0
    %v645 = vadd.f32 0.0, %v644
    %v646 = vpop.f32.mrf.mxu0
    %647 = vdwg.mxu0
    %v649 = vrot.slane %v645, 4
    %v651 = vadd.f32 %v161, %v649
    %v652 = vmul.f32 %v651, 0.5
    %v653 = vsel %vm125, %v651, %v652
    %v654 = vtanh.pop %v653
    %v655 = vmul.f32 %v654, 0.5
    %v656 = vadd.f32 %v655, 0.5
    %v658 = vrot.slane %v561, 7
    %v660 = vmul.f32 %v656, %v658
    %662 = vrot.lane.b32.xlu0 %v654, 64
    %v663 = vpop.permute.xlu0 %662
    %v665 = vmul.f32 %v656, %v663
    %667 = vrot.lane.b32.xlu0 %v665, 32
    %v668 = vpop.permute.xlu0 %667
    %v670 = vadd.f32 %v660, %v668
    %v671 = vtanh.pop %v670
    %673 = vrot.lane.b32.xlu0 %v671, 64
    %v674 = vpop.permute.xlu0 %673
    %v676 = vmul.f32 %v656, %v674
    %678 = vrot.lane.b32.xlu0 %v676, 32
    %v679 = vpop.permute.xlu0 %678
    %v681 = vrot.slane %v619, 4
    %682 = vrot.lane.b32.xlu0 %v681, 64
    %v683 = vpop.permute.xlu0 %682
    %v685 = vsel %vm147, %v679, %v683
    %v686 = vpack.c.bf16 %v685, %v685
    %v688 = vrot.slane %v686, 2
    %v690 = vsel %vm258, %v688, 0
    %692 = vmatpush.bf16.msra.mxu0 0
    %693 = vmatpush.bf16.msra.mxu0 0
    %694 = vmatpush.bf16.msra.mxu0 0
    %695 = vmatpush.bf16.msra.mxu0 0
    %696 = vmatpush.bf16.msra.mxu0 %v253
    %697 = vmatpush.bf16.msra.mxu0 %v252
    %698 = vmatpush.bf16.msra.mxu0 %v251
    %699 = vmatpush.bf16.msra.mxu0 %v250
    %700 = vmatmul.bf16.gmra.mxu0 %v690
    %v701 = vpop.f32.mrf.mxu0
    %v702 = vadd.f32 %v120, %v701
    %v703 = vpop.f32.mrf.mxu0
    %704 = vdwg.mxu0
    %v705 = vmul.f32 %v702, 0.5
    %v706 = vsel %vm125, %v702, %v705
    %v707 = vtanh.pop %v706
    %v708 = vmul.f32 %v707, 0.5
    %v709 = vadd.f32 %v708, 0.5
    %v710 = vmul.f32 %v709, %v613
    %712 = vrot.lane.b32.xlu0 %v707, 64
    %v713 = vpop.permute.xlu0 %712
    %v715 = vmul.f32 %v709, %v713
    %717 = vrot.lane.b32.xlu0 %v715, 32
    %v718 = vpop.permute.xlu0 %717
    %v720 = vadd.f32 %v710, %v718
    %v721 = vtanh.pop %v720
    %723 = vrot.lane.b32.xlu0 %v721, 64
    %v724 = vpop.permute.xlu0 %723
    %v726 = vmul.f32 %v709, %v724
    %728 = vrot.lane.b32.xlu0 %v726, 32
    %v729 = vpop.permute.xlu0 %728
    %731 = vst.msk [vmem:[#allocation2 + $0x4] sm:$0x1] %vm305, %v729
    %v732 = vpack.c.bf16 %v676, %v676
    %v734 = vrot.slane %v732, 2
    %735 = vrot.lane.b32.xlu0 %v734, 32
    %v736 = vpop.permute.xlu0 %735
    %v738 = vsel %vm147, %v736, 0
    %740 = vmatpush.bf16.msra.mxu0 0
    %741 = vmatpush.bf16.msra.mxu0 0
    %742 = vmatpush.bf16.msra.mxu0 0
    %743 = vmatpush.bf16.msra.mxu0 0
    %744 = vmatpush.bf16.msra.mxu0 0
    %745 = vmatpush.bf16.msra.mxu0 0
    %746 = vmatpush.bf16.msra.mxu0 %v178
    %747 = vmatpush.bf16.msra.mxu0 %v177
    %748 = vmatmul.bf16.gmra.mxu0 %v738
    %v749 = vpop.f32.mrf.mxu0
    %v750 = vadd.f32 0.0, %v749
    %v751 = vpop.f32.mrf.mxu0
    %752 = vdwg.mxu0
    %v754 = vrot.slane %v750, 3
    %v756 = vadd.f32 %v161, %v754
    %v757 = vmul.f32 %v756, 0.5
    %v758 = vsel %vm125, %v756, %v757
    %v759 = vtanh.pop %v758
    %v760 = vmul.f32 %v759, 0.5
    %v761 = vadd.f32 %v760, 0.5
    %v763 = vrot.slane %v670, 7
    %v765 = vmul.f32 %v761, %v763
    %767 = vrot.lane.b32.xlu0 %v759, 64
    %v768 = vpop.permute.xlu0 %767
    %v770 = vmul.f32 %v761, %v768
    %772 = vrot.lane.b32.xlu0 %v770, 32
    %v773 = vpop.permute.xlu0 %772
    %v775 = vadd.f32 %v765, %v773
    %v776 = vtanh.pop %v775
    %778 = vrot.lane.b32.xlu0 %v776, 64
    %v779 = vpop.permute.xlu0 %778
    %v781 = vmul.f32 %v761, %v779
    %783 = vrot.lane.b32.xlu0 %v781, 32
    %v784 = vpop.permute.xlu0 %783
    %v786 = vrot.slane %v726, 3
    %787 = vrot.lane.b32.xlu0 %v786, 64
    %v788 = vpop.permute.xlu0 %787
    %v790 = vsel %vm147, %v784, %v788
    %v791 = vpack.c.bf16 %v790, %v790
    %v793 = vshrl.u32 %v791, 16
    %v795 = vrot.slane %v793, 2
    %v797 = vsel %vm258, %v795, 0
    %799 = vmatpush.bf16.msra.mxu0 0
    %800 = vmatpush.bf16.msra.mxu0 0
    %801 = vmatpush.bf16.msra.mxu0 0
    %802 = vmatpush.bf16.msra.mxu0 0
    %803 = vmatpush.bf16.msra.mxu0 %v253
    %804 = vmatpush.bf16.msra.mxu0 %v252
    %805 = vmatpush.bf16.msra.mxu0 %v251
    %806 = vmatpush.bf16.msra.mxu0 %v250
    %807 = vmatmul.bf16.gmra.mxu0 %v797
    %v808 = vpop.f32.mrf.mxu0
    %v809 = vadd.f32 %v120, %v808
    %v810 = vpop.f32.mrf.mxu0
    %811 = vdwg.mxu0
    %v812 = vmul.f32 %v809, 0.5
    %v813 = vsel %vm125, %v809, %v812
    %v814 = vtanh.pop %v813
    %v815 = vmul.f32 %v814, 0.5
    %v816 = vadd.f32 %v815, 0.5
    %v817 = vmul.f32 %v816, %v720
    %819 = vrot.lane.b32.xlu0 %v814, 64
    %v820 = vpop.permute.xlu0 %819
    %v822 = vmul.f32 %v816, %v820
    %824 = vrot.lane.b32.xlu0 %v822, 32
    %v825 = vpop.permute.xlu0 %824
    %v827 = vadd.f32 %v817, %v825
    %v828 = vtanh.pop %v827
    %830 = vrot.lane.b32.xlu0 %v828, 64
    %v831 = vpop.permute.xlu0 %830
    %v833 = vmul.f32 %v816, %v831
    %835 = vrot.lane.b32.xlu0 %v833, 32
    %v836 = vpop.permute.xlu0 %835
    %838 = vst.msk [vmem:[#allocation2 + $0x5] sm:$0x1] %vm305, %v836
    %v839 = vpack.c.bf16 %v781, %v781
    %v841 = vshrl.u32 %v839, 16
    %v843 = vrot.slane %v841, 2
    %844 = vrot.lane.b32.xlu0 %v843, 32
    %v845 = vpop.permute.xlu0 %844
    %v847 = vsel %vm147, %v845, 0
    %849 = vmatpush.bf16.msra.mxu0 0
    %850 = vmatpush.bf16.msra.mxu0 0
    %851 = vmatpush.bf16.msra.mxu0 0
    %852 = vmatpush.bf16.msra.mxu0 0
    %853 = vmatpush.bf16.msra.mxu0 0
    %854 = vmatpush.bf16.msra.mxu0 0
    %855 = vmatpush.bf16.msra.mxu0 %v178
    %856 = vmatpush.bf16.msra.mxu0 %v177
    %857 = vmatmul.bf16.gmra.mxu0 %v847
    %v858 = vpop.f32.mrf.mxu0
    %v859 = vadd.f32 0.0, %v858
    %v860 = vpop.f32.mrf.mxu0
    %861 = vdwg.mxu0
    %v863 = vrot.slane %v859, 2
    %v865 = vadd.f32 %v161, %v863
    %v866 = vmul.f32 %v865, 0.5
    %v867 = vsel %vm125, %v865, %v866
    %v868 = vtanh.pop %v867
    %v869 = vmul.f32 %v868, 0.5
    %v870 = vadd.f32 %v869, 0.5
    %v872 = vrot.slane %v775, 7
    %v874 = vmul.f32 %v870, %v872
    %876 = vrot.lane.b32.xlu0 %v868, 64
    %v877 = vpop.permute.xlu0 %876
    %v879 = vmul.f32 %v870, %v877
    %881 = vrot.lane.b32.xlu0 %v879, 32
    %v882 = vpop.permute.xlu0 %881
    %v884 = vadd.f32 %v874, %v882
    %v885 = vtanh.pop %v884
    %887 = vrot.lane.b32.xlu0 %v885, 64
    %v888 = vpop.permute.xlu0 %887
    %v890 = vmul.f32 %v870, %v888
    %892 = vrot.lane.b32.xlu0 %v890, 32
    %v893 = vpop.permute.xlu0 %892
    %v895 = vrot.slane %v833, 2
    %896 = vrot.lane.b32.xlu0 %v895, 64
    %v897 = vpop.permute.xlu0 %896
    %v899 = vsel %vm147, %v893, %v897
    %v900 = vpack.c.bf16 %v899, %v899
    %v902 = vrot.slane %v900, 3
    %v904 = vsel %vm258, %v902, 0
    %906 = vmatpush.bf16.msra.mxu0 0
    %907 = vmatpush.bf16.msra.mxu0 0
    %908 = vmatpush.bf16.msra.mxu0 0
    %909 = vmatpush.bf16.msra.mxu0 0
    %910 = vmatpush.bf16.msra.mxu0 %v253
    %911 = vmatpush.bf16.msra.mxu0 %v252
    %912 = vmatpush.bf16.msra.mxu0 %v251
    %913 = vmatpush.bf16.msra.mxu0 %v250
    %914 = vmatmul.bf16.gmra.mxu0 %v904
    %v915 = vpop.f32.mrf.mxu0
    %v916 = vadd.f32 %v120, %v915
    %v917 = vpop.f32.mrf.mxu0
    %918 = vdwg.mxu0
    %v919 = vmul.f32 %v916, 0.5
    %v920 = vsel %vm125, %v916, %v919
    %v921 = vtanh.pop %v920
    %v922 = vmul.f32 %v921, 0.5
    %v923 = vadd.f32 %v922, 0.5
    %v924 = vmul.f32 %v923, %v827
    %926 = vrot.lane.b32.xlu0 %v921, 64
    %v927 = vpop.permute.xlu0 %926
    %v929 = vmul.f32 %v923, %v927
    %931 = vrot.lane.b32.xlu0 %v929, 32
    %v932 = vpop.permute.xlu0 %931
    %v934 = vadd.f32 %v924, %v932
    %v935 = vtanh.pop %v934
    %937 = vrot.lane.b32.xlu0 %v935, 64
    %v938 = vpop.permute.xlu0 %937
    %v940 = vmul.f32 %v923, %v938
    %942 = vrot.lane.b32.xlu0 %v940, 32
    %v943 = vpop.permute.xlu0 %942
    %945 = vst.msk [vmem:[#allocation2 + $0x6] sm:$0x1] %vm305, %v943
    %v946 = vpack.c.bf16 %v890, %v890
    %v948 = vrot.slane %v946, 3
    %949 = vrot.lane.b32.xlu0 %v948, 32
    %v950 = vpop.permute.xlu0 %949
    %v952 = vsel %vm147, %v950, 0
    %954 = vmatpush.bf16.msra.mxu0 0
    %955 = vmatpush.bf16.msra.mxu0 0
    %956 = vmatpush.bf16.msra.mxu0 0
    %957 = vmatpush.bf16.msra.mxu0 0
    %958 = vmatpush.bf16.msra.mxu0 0
    %959 = vmatpush.bf16.msra.mxu0 0
    %960 = vmatpush.bf16.msra.mxu0 %v178
    %961 = vmatpush.bf16.msra.mxu0 %v177
    %962 = vmatmul.bf16.gmra.mxu0 %v952
    %v963 = vpop.f32.mrf.mxu0
    %v964 = vadd.f32 0.0, %v963
    %v965 = vpop.f32.mrf.mxu0
    %966 = vdwg.mxu0
    %v968 = vrot.slane %v964, 1
    %v970 = vadd.f32 %v161, %v968
    %v971 = vmul.f32 %v970, 0.5
    %v972 = vsel %vm125, %v970, %v971
    %v973 = vtanh.pop %v972
    %v974 = vmul.f32 %v973, 0.5
    %v975 = vadd.f32 %v974, 0.5
    %v977 = vrot.slane %v884, 7
    %v979 = vmul.f32 %v975, %v977
    %981 = vrot.lane.b32.xlu0 %v973, 64
    %v982 = vpop.permute.xlu0 %981
    %v984 = vmul.f32 %v975, %v982
    %986 = vrot.lane.b32.xlu0 %v984, 32
    %v987 = vpop.permute.xlu0 %986
    %v989 = vadd.f32 %v979, %v987
    %v990 = vtanh.pop %v989
    %992 = vrot.lane.b32.xlu0 %v990, 64
    %v993 = vpop.permute.xlu0 %992
    %v995 = vmul.f32 %v975, %v993
    %997 = vrot.lane.b32.xlu0 %v995, 32
    %v998 = vpop.permute.xlu0 %997
    %v1000 = vrot.slane %v940, 1
    %1001 = vrot.lane.b32.xlu0 %v1000, 64
    %v1002 = vpop.permute.xlu0 %1001
    %v1004 = vsel %vm147, %v998, %v1002
    %v1005 = vpack.c.bf16 %v1004, %v1004
    %v1007 = vshrl.u32 %v1005, 16
    %v1009 = vrot.slane %v1007, 3
    %v1011 = vsel %vm258, %v1009, 0
    %1013 = vmatpush.bf16.msra.mxu0 0
    %1014 = vmatpush.bf16.msra.mxu0 0
    %1015 = vmatpush.bf16.msra.mxu0 0
    %1016 = vmatpush.bf16.msra.mxu0 0
    %1017 = vmatpush.bf16.msra.mxu0 %v253
    %1018 = vmatpush.bf16.msra.mxu0 %v252
    %1019 = vmatpush.bf16.msra.mxu0 %v251
    %1020 = vmatpush.bf16.msra.mxu0 %v250
    %1021 = vmatmul.bf16.gmra.mxu0 %v1011
    %v1022 = vpop.f32.mrf.mxu0
    %v1023 = vadd.f32 %v120, %v1022
    %v1024 = vpop.f32.mrf.mxu0
    %1025 = vdwg.mxu0
    %v1026 = vmul.f32 %v1023, 0.5
    %v1027 = vsel %vm125, %v1023, %v1026
    %v1028 = vtanh.pop %v1027
    %v1029 = vmul.f32 %v1028, 0.5
    %v1030 = vadd.f32 %v1029, 0.5
    %v1031 = vmul.f32 %v1030, %v934
    %1033 = vrot.lane.b32.xlu0 %v1028, 64
    %v1034 = vpop.permute.xlu0 %1033
    %v1036 = vmul.f32 %v1030, %v1034
    %1038 = vrot.lane.b32.xlu0 %v1036, 32
    %v1039 = vpop.permute.xlu0 %1038
    %v1041 = vadd.f32 %v1031, %v1039
    %v1042 = vtanh.pop %v1041
    %1044 = vrot.lane.b32.xlu0 %v1042, 64
    %v1045 = vpop.permute.xlu0 %1044
    %v1047 = vmul.f32 %v1030, %v1045
    %1049 = vrot.lane.b32.xlu0 %v1047, 32
    %v1050 = vpop.permute.xlu0 %1049
    %1052 = vst.msk [vmem:[#allocation2 + $0x7] sm:$0x1] %vm305, %v1050
    %vm1053 = vcmask 261127
    %1054 = vst.msk [vmem:[%s11 - $0x7] sm:$0x80] %vm1053, %v998
    %1056 = vrot.lane.b32.xlu0 %v989, 96
    %v1057 = vpop.permute.xlu0 %1056
    %1059 = vst.msk [vmem:[%s12 - $0x7] sm:$0x80] %vm1053, %v1057
    %1060 = vst.msk [vmem:[%s11 + $0x1] sm:$0x1] %vm305, %v1050
    %1062 = vrot.lane.b32.xlu0 %v1041, 96
    %v1063 = vpop.permute.xlu0 %1062
    %1065 = vst.msk [vmem:[%s12 + $0x1] sm:$0x1] %vm305, %v1063
    %v1066 = vld [vmem:[#allocation2] sm:$0xff]
    %v1067 = vpack.c.bf16 %v1066, %v1066
    %v1068 = vld [vmem:[%s9] sm:$0x1]
    %v1070 = vperm.slane %v1068, 0
    %v1076 = vunpack.c.l.b16 %v115
    %v1077 = vunpack.c.l.b16 %v116
    %v1078 = vunpack.c.l.b16 %v117
    %v1079 = vunpack.c.l.b16 %v118
    %v1080 = vpack.c.b16 %v1077, %v1076
    %v1081 = vpack.c.b16 %v1079, %v1078
    %v1085 = vsel %vm147, %v1067, 0
    %1087 = vmatpush.bf16.msra.mxu0 0
    %1088 = vmatpush.bf16.msra.mxu0 0
    %1089 = vmatpush.bf16.msra.mxu0 0
    %1090 = vmatpush.bf16.msra.mxu0 0
    %1091 = vmatpush.bf16.msra.mxu0 0
    %1092 = vmatpush.bf16.msra.mxu0 0
    %1093 = vmatpush.bf16.msra.mxu0 %v1081
    %1094 = vmatpush.bf16.msra.mxu0 %v1080
    %1095 = vmatmul.bf16.gmra.mxu0 %v1085
    %v1096 = vpop.f32.mrf.mxu0
    %v1097 = vadd.f32 %v1070, %v1096
    %v1098 = vpop.f32.mrf.mxu0
    %1099 = vdwg.mxu0
    %v1100 = vsel %vm147, %v1097, -inf
    %1101 = vmax.xlane.f32.xlu0 %v1100
    %v1102 = vpop.xlane.xlu0 %1101
    %v1103 = vsub.f32 %v1097, %v1102
    %v1104 = vmul.f32 %v1103, 1.442695
    %v1105 = vpow.pop %v1104
    %v1106 = vsel %vm147, %v1105, 0.0
    %1107 = vadd.xlane.f32.xlu0 %v1106
    %v1108 = vpop.xlane.xlu0 %1107
    %v1109 = vlog2.pop %v1108
    %v1110 = vmul.f32 %v1109, 0.6931472
    %v1111 = vsub.f32 %v1103, %v1110
    %1112 = vst.msk [vmem:[#allocation11] sm:$0xff] %vm147, %v1111
    // Predicated region
    $region58: #{lstm_forward.1} parent=1 // pred_check
      _
    $region59: #{lstm_forward.1} parent=1 // pred_check_branch
      %1114 = sbr.rel (0) target = $region61
    $region60: #{lstm_forward.1} parent=1 // pred_region
      %1116 = vsyncadd [#allocation5], 0
      %s1118 = sshll.u32 [#allocation11], 4
      %s1119 = int_to_ptr.vmem [resolvable:$true] %s1118
      %s1120 = sshll.u32 %s10, 4
      %s1121 = int_to_ptr.hbm [resolvable:$true] %s1120
      %1123 = dma.vmem_to_hbm [thread:$0]  %s1119, 128, %s1121, [#allocation5]
    $region61: #{lstm_forward.1} parent=1 // pred_fallthru
      _
    // Predicated region
    $region62: #{lstm_forward.1} parent=1 // pred_check
      _
    $region63: #{lstm_forward.1} parent=1 // pred_check_branch
      %1125 = sbr.rel (0) target = $region65
    $region64: #{lstm_forward.1} parent=1 // pred_region
      _
    $region65: #{lstm_forward.1} parent=1 // pred_fallthru
      _
    // Predicated region
    $region66: #{lstm_forward.1} parent=1 // pred_check
      _
    $region67: #{lstm_forward.1} parent=1 // pred_check_branch
      %1127 = sbr.rel (0) target = $region69
    $region68: #{lstm_forward.1} parent=1 // pred_region
      _
    $region69: #{lstm_forward.1} parent=1 // pred_fallthru
      _
    // Predicated region
    $region70: #{lstm_forward.1} parent=1 // pred_check
      _
    $region71: #{lstm_forward.1} parent=1 // pred_check_branch
      %1129 = sbr.rel (0) target = $region73
    $region72: #{lstm_forward.1} parent=1 // pred_region
      %1131 = dma.done [#allocation5], 128
    $region73: #{lstm_forward.1} parent=1 // pred_fallthru
      _
    // Predicated region
    $region74: #{lstm_forward.1} parent=1 // pred_check
      _
    $region75: #{lstm_forward.1} parent=1 // pred_check_branch
      %1133 = sbr.rel (0) target = $region77
    $region76: #{lstm_forward.1} parent=1 // pred_region
      _
    $region77: #{lstm_forward.1} parent=1 // pred_fallthru
      _
    // Predicated region
    $region78: #{lstm_forward.1} parent=1 // pred_check
      _
    $region79: #{lstm_forward.1} parent=1 // pred_check_branch
      %1135 = sbr.rel (0) target = $region81
    $region80: #{lstm_forward.1} parent=1 // pred_region
      _
    $region81: #{lstm_forward.1} parent=1 // pred_fallthru
      _
    %1136 = vsyncpa [#allocation4], 1
    %1137 = vsyncpa [#allocation7], 1
    %1138 = vsyncpa [#allocation10], 1
    %1139 = vsyncpa [#allocation5], 1

</llo_original>
